<compile_context>
chip_gen: v5e
topology: v5e:2x2
jax: 0.10.0
libtpu: 0.0.40
codegen_flags: <defaults>
</compile_context>

<pallas_src>
from functools import partial

import jax
import jax.numpy as jnp
from jax.experimental import pallas as pl
from jax.experimental.pallas import tpu as pltpu


def _block_kernel(x_ref, w_ref, bias_ref, a_ref, b_ref, mask_ref, gmat_ref,
                  o_ref, *, wp: int, lout: int, inv_n: float, eps: float):
    # x_ref:    (1, Cin, Lin)  bf16 padded input, width-flattened (Lin = (H+2)*wp + 2)
    # w_ref:    (9, Ct, Cin)   bf16 weight-standardized conv taps (tap = ky*3+kx)
    # bias_ref: (Ct, 1)        f32 conv bias
    # a_ref/b_ref: (1, Ct, 1)  f32 fused affine: a = gamma*(scale+1), b = beta*(scale+1)+shift
    # mask_ref: (1, lout)      f32, 1.0 on valid columns (col % wp < W)
    # gmat_ref: (Ct, Ct)       f32 block-diagonal "same group" membership
    # o_ref:    (1, Ct, lout)  f32 output (channel-major, lane-dense)
    x = x_ref[0]                                           # (Cin, Lin) bf16

    # --- conv as 9 shifted accumulating matmuls (MXU, bf16 in / f32 acc) ---
    acc = None
    for ky in range(3):
        for kx in range(3):
            start = ky * wp + kx
            slab = x[:, start:start + lout]                # (Cin, lout) static slice
            part = jnp.dot(w_ref[ky * 3 + kx], slab,
                           preferred_element_type=jnp.float32)  # (Ct, lout)
            acc = part if acc is None else acc + part
    y = acc + bias_ref[...]                                # (Ct, lout) + (Ct, 1)

    # --- GroupNorm (stable two-pass: subtract group mean before squaring) ---
    mask = mask_ref[...]                                   # (1, lout)
    gmat = gmat_ref[...]                                   # (Ct, Ct)
    ch_sum = jnp.sum(y * mask, axis=1, keepdims=True)      # (Ct, 1)
    mean_c = jnp.dot(gmat, ch_sum,
                     preferred_element_type=jnp.float32) * inv_n    # (Ct, 1)
    cent = y - mean_c
    ch_sq = jnp.sum(cent * cent * mask, axis=1, keepdims=True)      # (Ct, 1)
    var_c = jnp.dot(gmat, ch_sq,
                    preferred_element_type=jnp.float32) * inv_n     # (Ct, 1)
    yn = cent * jax.lax.rsqrt(var_c + eps)

    # --- fused gamma/beta + optional scale/shift, then SiLU ---
    yn = yn * a_ref[0] + b_ref[0]
    o_ref[0] = yn * jax.nn.sigmoid(yn)


def _pick_cout_tile(cout, groups, cap=128):
    """Largest channel tile <= cap that divides Cout, holds whole groups and is
    sublane-aligned; falls back to the full channel dim."""
    cpg = cout // groups
    if cout <= cap:
        return cout
    best = cout
    t = cpg
    while t <= cap:
        if cout % t == 0 and t % 8 == 0:
            best = t
        t += cpg
    return best


def block_forward(x, weight, bias, gamma, beta, scale_shift=None, groups=8,
                  cout_tile=None):
    """Pallas equivalent of Block.forward. x is NCHW; returns NCHW float32."""
    B, Cin, H, W = x.shape
    Cout = weight.shape[0]
    assert Cout % groups == 0
    cpg = Cout // groups

    if cout_tile is None:
        cout_tile = _pick_cout_tile(Cout, groups)
    assert Cout % cout_tile == 0 and cout_tile % cpg == 0
    assert cout_tile == Cout or cout_tile % 8 == 0
    n_ct = Cout // cout_tile

    # --- weight standardization (parameter-sized, plain JAX) ---
    eps_w = 1e-5 if x.dtype == jnp.float32 else 1e-3
    w32 = weight.astype(jnp.float32)
    w_mean = jnp.mean(w32, axis=(1, 2, 3), keepdims=True)
    w_var = jnp.var(w32, axis=(1, 2, 3), keepdims=True)          # unbiased=False
    w_std = (w32 - w_mean) * jax.lax.rsqrt(w_var + eps_w)
    # (O, I, ky, kx) -> (tap, O, I), bf16 for the MXU
    w_taps = jnp.transpose(w_std, (2, 3, 0, 1)).reshape(9, Cout, Cin)
    w_taps = w_taps.astype(jnp.bfloat16)

    # --- padded input, channel-major & width-flattened (read once, no im2col) ---
    wp = W + 2
    lout = H * wp
    lin = (H + 2) * wp + 2      # +2 keeps the last tap's shifted slab in bounds
    x_pad = jnp.pad(x.astype(jnp.float32), ((0, 0), (0, 0), (1, 1), (1, 1)))
    x_flat = jnp.pad(x_pad.reshape(B, Cin, (H + 2) * wp), ((0, 0), (0, 0), (0, 2)))
    x_flat = x_flat.astype(jnp.bfloat16)

    # valid-column mask for the GroupNorm statistics (wrap columns excluded)
    col = jnp.arange(lout)
    mask = ((col % wp) < W).astype(jnp.float32).reshape(1, lout)

    # fused affine: y * a + b with a = gamma*(scale+1), b = beta*(scale+1)+shift
    gamma2 = gamma.reshape(1, Cout).astype(jnp.float32)
    beta2 = beta.reshape(1, Cout).astype(jnp.float32)
    if scale_shift is None:
        a = jnp.broadcast_to(gamma2, (B, Cout))
        b = jnp.broadcast_to(beta2, (B, Cout))
    else:
        scale, shift = scale_shift
        scale = scale.reshape(B, Cout).astype(jnp.float32)
        shift = shift.reshape(B, Cout).astype(jnp.float32)
        a = gamma2 * (scale + 1.0)
        b = beta2 * (scale + 1.0) + shift
    a = a.reshape(B, Cout, 1)
    b = b.reshape(B, Cout, 1)
    bias_col = bias.reshape(Cout, 1).astype(jnp.float32)

    # block-diagonal "same group" matrix for one channel tile (pattern repeats)
    gidx = jnp.arange(cout_tile) // cpg
    gmat = (gidx[:, None] == gidx[None, :]).astype(jnp.float32)   # (Ct, Ct)

    inv_n = 1.0 / float(cpg * H * W)
    kernel = partial(_block_kernel, wp=wp, lout=lout, inv_n=inv_n, eps=1e-5)

    # VMEM budget: double-buffered inputs/outputs + the f32 accumulator (64 MiB cap
    # keeps headroom on v7x's 64 MiB physical VMEM).
    est = (2 * (Cin * lin * 2 + 9 * cout_tile * Cin * 2 + cout_tile * lout * 4
                + (3 * cout_tile + lout + cout_tile * cout_tile) * 4)
           + cout_tile * lout * 4)
    vmem_limit = int(min(64 * 2 ** 20, max(16 * 2 ** 20, 2 * est)))

    out = pl.pallas_call(
        kernel,
        out_shape=jax.ShapeDtypeStruct((B, Cout, lout), jnp.float32),
        grid_spec=pltpu.PrefetchScalarGridSpec(
            num_scalar_prefetch=0,
            grid=(B, n_ct),
            in_specs=[
                pl.BlockSpec((1, Cin, lin), lambda bi, j: (bi, 0, 0)),        # x slab
                pl.BlockSpec((9, cout_tile, Cin), lambda bi, j: (0, j, 0)),   # conv taps
                pl.BlockSpec((cout_tile, 1), lambda bi, j: (j, 0)),           # conv bias
                pl.BlockSpec((1, cout_tile, 1), lambda bi, j: (bi, j, 0)),    # affine a
                pl.BlockSpec((1, cout_tile, 1), lambda bi, j: (bi, j, 0)),    # affine b
                pl.BlockSpec((1, lout), lambda bi, j: (0, 0)),                # valid mask
                pl.BlockSpec((cout_tile, cout_tile), lambda bi, j: (0, 0)),   # group matrix
            ],
            out_specs=pl.BlockSpec((1, cout_tile, lout), lambda bi, j: (bi, j, 0)),
        ),
        compiler_params=pltpu.CompilerParams(
            dimension_semantics=("parallel", "parallel"),
            vmem_limit_bytes=vmem_limit),
    )(x_flat, w_taps, bias_col, a, b, mask, gmat)

    # (B, Cout, H*(W+2)) -> drop the 2 wrap columns per row -> NCHW (no transpose)
    return out.reshape(B, Cout, H, wp)[:, :, :, :W]


def _reference_block(x, weight, bias, gamma, beta, scale, shift, groups=8,
                     conv_dtype=jnp.float32):
    """Pure-JAX reference of Block.forward (NCHW). `conv_dtype` controls the
    conv operand precision so the bf16-MXU kernel can be checked tightly."""
    eps_w = 1e-5
    w32 = weight.astype(jnp.float32)
    w_mean = jnp.mean(w32, axis=(1, 2, 3), keepdims=True)
    w_var = jnp.var(w32, axis=(1, 2, 3), keepdims=True)
    w_std = (w32 - w_mean) * jax.lax.rsqrt(w_var + eps_w)
    y = jax.lax.conv_general_dilated(
        x.astype(conv_dtype), w_std.astype(conv_dtype),
        window_strides=(1, 1), padding="SAME",
        dimension_numbers=("NCHW", "OIHW", "NCHW"),
        preferred_element_type=jnp.float32)
    y = y + bias[None, :, None, None]

    B, C, H, W = y.shape
    yg = y.reshape(B, groups, C // groups, H, W)
    m = jnp.mean(yg, axis=(2, 3, 4), keepdims=True)
    v = jnp.var(yg, axis=(2, 3, 4), keepdims=True)
    yn = ((yg - m) * jax.lax.rsqrt(v + 1e-5)).reshape(B, C, H, W)
    yn = yn * gamma[None, :, None, None] + beta[None, :, None, None]
    if scale is not None:
        yn = yn * (scale[:, :, None, None] + 1.0) + shift[:, :, None, None]
    return yn * jax.nn.sigmoid(yn)


if __name__ == "__main__":
    B, Cin, Cout, H, W, groups = 2, 4, 32, 16, 16, 8

    key = jax.random.PRNGKey(0)
    ks = jax.random.split(key, 5)
    x = jax.random.normal(ks[0], (B, Cin, H, W), jnp.float32)
    weight = jax.random.normal(ks[1], (Cout, Cin, 3, 3), jnp.float32) * 0.1
    bias = jax.random.normal(ks[2], (Cout,), jnp.float32) * 0.1
    gamma = jnp.ones((Cout,), jnp.float32)      # nn.GroupNorm default init
    beta = jnp.zeros((Cout,), jnp.float32)
    scale = jax.random.normal(ks[3], (B, Cout), jnp.float32) * 0.1
    shift = jax.random.normal(ks[4], (B, Cout), jnp.float32) * 0.1

    # main path: scale_shift provided, channel-tiled grid (2 tiles of 16)
    out = block_forward(x, weight, bias, gamma, beta,
                        scale_shift=(scale, shift), groups=groups, cout_tile=16)
    out = jax.block_until_ready(out)
    assert out.shape == (B, Cout, H, W)

    # tight check vs a reference that uses the same bf16 conv operands
    ref_bf16 = _reference_block(x, weight, bias, gamma, beta, scale, shift,
                                groups=groups, conv_dtype=jnp.bfloat16)
    err = float(jnp.max(jnp.abs(out - ref_bf16)))
    assert jnp.allclose(out, ref_bf16, atol=1e-3, rtol=1e-3), f"bf16-ref max_err={err}"

    # sanity check vs the full-f32 reference (bf16 MXU rounding only)
    ref_f32 = _reference_block(x, weight, bias, gamma, beta, scale, shift,
                               groups=groups, conv_dtype=jnp.float32)
    err32 = float(jnp.max(jnp.abs(out - ref_f32)))
    assert jnp.allclose(out, ref_f32, atol=5e-2, rtol=5e-2), f"f32-ref max_err={err32}"

    # scale_shift=None path, default (single) channel tile
    out2 = jax.block_until_ready(
        block_forward(x, weight, bias, gamma, beta, scale_shift=None, groups=groups))
    ref2 = _reference_block(x, weight, bias, gamma, beta, None, None,
                            groups=groups, conv_dtype=jnp.bfloat16)
    err2 = float(jnp.max(jnp.abs(out2 - ref2)))
    assert jnp.allclose(out2, ref2, atol=1e-3, rtol=1e-3), f"none-path max_err={err2}"

    print("KERNEL_OK")
</pallas_src>

<mosaic_0001>
module attributes {stable_mosaic.version = 11 : i64} {
  func.func @_block_kernel(%arg0: i32, %arg1: i32, %arg2: memref<1x4x326xbf16, #tpu.memory_space<vmem>>, %arg3: memref<9x16x4xbf16, #tpu.memory_space<vmem>>, %arg4: memref<16x1xf32, #tpu.memory_space<vmem>>, %arg5: memref<1x16x1xf32, #tpu.memory_space<vmem>>, %arg6: memref<1x16x1xf32, #tpu.memory_space<vmem>>, %arg7: memref<1x288xf32, #tpu.memory_space<vmem>>, %arg8: memref<16x16xf32, #tpu.memory_space<vmem>>, %arg9: memref<1x16x288xf32, #tpu.memory_space<vmem>>) attributes {dimension_semantics = [#tpu.dimension_semantics<parallel>, #tpu.dimension_semantics<parallel>], iteration_bounds = array<i64: 2, 2>, scalar_prefetch = 0 : i64, scratch_operands = 0 : i64, tpu.core_type = #tpu.core_type<tc>, window_params = [{transform_indices = @transform_0, window_bounds = array<i64: 1, 4, 326>}, {transform_indices = @transform_1, window_bounds = array<i64: 9, 16, 4>}, {transform_indices = @transform_2, window_bounds = array<i64: 16, 1>}, {transform_indices = @transform_3, window_bounds = array<i64: 1, 16, 1>}, {transform_indices = @transform_4, window_bounds = array<i64: 1, 16, 1>}, {pipeline_mode = #tpu.pipeline_mode<synchronous>, transform_indices = @transform_5, window_bounds = array<i64: 1, 288>}, {pipeline_mode = #tpu.pipeline_mode<synchronous>, transform_indices = @transform_6, window_bounds = array<i64: 16, 16>}, {transform_indices = @transform_7, window_bounds = array<i64: 1, 16, 288>}]} {
    %c0 = arith.constant 0 : index
    %c0_0 = arith.constant 0 : index
    %c0_1 = arith.constant 0 : index
    %0 = vector.load %arg2[%c0, %c0_0, %c0_1] : memref<1x4x326xbf16, #tpu.memory_space<vmem>>, vector<1x4x326xbf16>
    %1 = vector.shape_cast %0 : vector<1x4x326xbf16> to vector<4x326xbf16>
    %2 = vector.extract_strided_slice %1 {offsets = [0, 0], sizes = [4, 288], strides = [1, 1]} : vector<4x326xbf16> to vector<4x288xbf16>
    %c0_2 = arith.constant 0 : index
    %c0_3 = arith.constant 0 : index
    %c0_4 = arith.constant 0 : index
    %3 = vector.load %arg3[%c0_2, %c0_3, %c0_4] : memref<9x16x4xbf16, #tpu.memory_space<vmem>>, vector<1x16x4xbf16>
    %4 = vector.shape_cast %3 : vector<1x16x4xbf16> to vector<16x4xbf16>
    %cst = arith.constant dense<0.000000e+00> : vector<16x288xf32>
    %5 = tpu.matmul %4, %2, %cst {dimension_numbers = #tpu.dot_dimension_numbers<[1], [0], [0], [1], [0, 0, 1, 1], [], []>} : vector<16x4xbf16>, vector<4x288xbf16>, vector<16x288xf32> -> vector<16x288xf32>
    %6 = vector.extract_strided_slice %1 {offsets = [0, 1], sizes = [4, 288], strides = [1, 1]} : vector<4x326xbf16> to vector<4x288xbf16>
    %c1 = arith.constant 1 : index
    %c0_5 = arith.constant 0 : index
    %c0_6 = arith.constant 0 : index
    %7 = vector.load %arg3[%c1, %c0_5, %c0_6] : memref<9x16x4xbf16, #tpu.memory_space<vmem>>, vector<1x16x4xbf16>
    %8 = vector.shape_cast %7 : vector<1x16x4xbf16> to vector<16x4xbf16>
    %cst_7 = arith.constant dense<0.000000e+00> : vector<16x288xf32>
    %9 = tpu.matmul %8, %6, %cst_7 {dimension_numbers = #tpu.dot_dimension_numbers<[1], [0], [0], [1], [0, 0, 1, 1], [], []>} : vector<16x4xbf16>, vector<4x288xbf16>, vector<16x288xf32> -> vector<16x288xf32>
    %10 = arith.addf %5, %9 : vector<16x288xf32>
    %11 = vector.extract_strided_slice %1 {offsets = [0, 2], sizes = [4, 288], strides = [1, 1]} : vector<4x326xbf16> to vector<4x288xbf16>
    %c2 = arith.constant 2 : index
    %c0_8 = arith.constant 0 : index
    %c0_9 = arith.constant 0 : index
    %12 = vector.load %arg3[%c2, %c0_8, %c0_9] : memref<9x16x4xbf16, #tpu.memory_space<vmem>>, vector<1x16x4xbf16>
    %13 = vector.shape_cast %12 : vector<1x16x4xbf16> to vector<16x4xbf16>
    %cst_10 = arith.constant dense<0.000000e+00> : vector<16x288xf32>
    %14 = tpu.matmul %13, %11, %cst_10 {dimension_numbers = #tpu.dot_dimension_numbers<[1], [0], [0], [1], [0, 0, 1, 1], [], []>} : vector<16x4xbf16>, vector<4x288xbf16>, vector<16x288xf32> -> vector<16x288xf32>
    %15 = arith.addf %10, %14 : vector<16x288xf32>
    %16 = vector.extract_strided_slice %1 {offsets = [0, 18], sizes = [4, 288], strides = [1, 1]} : vector<4x326xbf16> to vector<4x288xbf16>
    %c3 = arith.constant 3 : index
    %c0_11 = arith.constant 0 : index
    %c0_12 = arith.constant 0 : index
    %17 = vector.load %arg3[%c3, %c0_11, %c0_12] : memref<9x16x4xbf16, #tpu.memory_space<vmem>>, vector<1x16x4xbf16>
    %18 = vector.shape_cast %17 : vector<1x16x4xbf16> to vector<16x4xbf16>
    %cst_13 = arith.constant dense<0.000000e+00> : vector<16x288xf32>
    %19 = tpu.matmul %18, %16, %cst_13 {dimension_numbers = #tpu.dot_dimension_numbers<[1], [0], [0], [1], [0, 0, 1, 1], [], []>} : vector<16x4xbf16>, vector<4x288xbf16>, vector<16x288xf32> -> vector<16x288xf32>
    %20 = arith.addf %15, %19 : vector<16x288xf32>
    %21 = vector.extract_strided_slice %1 {offsets = [0, 19], sizes = [4, 288], strides = [1, 1]} : vector<4x326xbf16> to vector<4x288xbf16>
    %c4 = arith.constant 4 : index
    %c0_14 = arith.constant 0 : index
    %c0_15 = arith.constant 0 : index
    %22 = vector.load %arg3[%c4, %c0_14, %c0_15] : memref<9x16x4xbf16, #tpu.memory_space<vmem>>, vector<1x16x4xbf16>
    %23 = vector.shape_cast %22 : vector<1x16x4xbf16> to vector<16x4xbf16>
    %cst_16 = arith.constant dense<0.000000e+00> : vector<16x288xf32>
    %24 = tpu.matmul %23, %21, %cst_16 {dimension_numbers = #tpu.dot_dimension_numbers<[1], [0], [0], [1], [0, 0, 1, 1], [], []>} : vector<16x4xbf16>, vector<4x288xbf16>, vector<16x288xf32> -> vector<16x288xf32>
    %25 = arith.addf %20, %24 : vector<16x288xf32>
    %26 = vector.extract_strided_slice %1 {offsets = [0, 20], sizes = [4, 288], strides = [1, 1]} : vector<4x326xbf16> to vector<4x288xbf16>
    %c5 = arith.constant 5 : index
    %c0_17 = arith.constant 0 : index
    %c0_18 = arith.constant 0 : index
    %27 = vector.load %arg3[%c5, %c0_17, %c0_18] : memref<9x16x4xbf16, #tpu.memory_space<vmem>>, vector<1x16x4xbf16>
    %28 = vector.shape_cast %27 : vector<1x16x4xbf16> to vector<16x4xbf16>
    %cst_19 = arith.constant dense<0.000000e+00> : vector<16x288xf32>
    %29 = tpu.matmul %28, %26, %cst_19 {dimension_numbers = #tpu.dot_dimension_numbers<[1], [0], [0], [1], [0, 0, 1, 1], [], []>} : vector<16x4xbf16>, vector<4x288xbf16>, vector<16x288xf32> -> vector<16x288xf32>
    %30 = arith.addf %25, %29 : vector<16x288xf32>
    %31 = vector.extract_strided_slice %1 {offsets = [0, 36], sizes = [4, 288], strides = [1, 1]} : vector<4x326xbf16> to vector<4x288xbf16>
    %c6 = arith.constant 6 : index
    %c0_20 = arith.constant 0 : index
    %c0_21 = arith.constant 0 : index
    %32 = vector.load %arg3[%c6, %c0_20, %c0_21] : memref<9x16x4xbf16, #tpu.memory_space<vmem>>, vector<1x16x4xbf16>
    %33 = vector.shape_cast %32 : vector<1x16x4xbf16> to vector<16x4xbf16>
    %cst_22 = arith.constant dense<0.000000e+00> : vector<16x288xf32>
    %34 = tpu.matmul %33, %31, %cst_22 {dimension_numbers = #tpu.dot_dimension_numbers<[1], [0], [0], [1], [0, 0, 1, 1], [], []>} : vector<16x4xbf16>, vector<4x288xbf16>, vector<16x288xf32> -> vector<16x288xf32>
    %35 = arith.addf %30, %34 : vector<16x288xf32>
    %36 = vector.extract_strided_slice %1 {offsets = [0, 37], sizes = [4, 288], strides = [1, 1]} : vector<4x326xbf16> to vector<4x288xbf16>
    %c7 = arith.constant 7 : index
    %c0_23 = arith.constant 0 : index
    %c0_24 = arith.constant 0 : index
    %37 = vector.load %arg3[%c7, %c0_23, %c0_24] : memref<9x16x4xbf16, #tpu.memory_space<vmem>>, vector<1x16x4xbf16>
    %38 = vector.shape_cast %37 : vector<1x16x4xbf16> to vector<16x4xbf16>
    %cst_25 = arith.constant dense<0.000000e+00> : vector<16x288xf32>
    %39 = tpu.matmul %38, %36, %cst_25 {dimension_numbers = #tpu.dot_dimension_numbers<[1], [0], [0], [1], [0, 0, 1, 1], [], []>} : vector<16x4xbf16>, vector<4x288xbf16>, vector<16x288xf32> -> vector<16x288xf32>
    %40 = arith.addf %35, %39 : vector<16x288xf32>
    %41 = vector.extract_strided_slice %1 {offsets = [0, 38], sizes = [4, 288], strides = [1, 1]} : vector<4x326xbf16> to vector<4x288xbf16>
    %c8 = arith.constant 8 : index
    %c0_26 = arith.constant 0 : index
    %c0_27 = arith.constant 0 : index
    %42 = vector.load %arg3[%c8, %c0_26, %c0_27] : memref<9x16x4xbf16, #tpu.memory_space<vmem>>, vector<1x16x4xbf16>
    %43 = vector.shape_cast %42 : vector<1x16x4xbf16> to vector<16x4xbf16>
    %cst_28 = arith.constant dense<0.000000e+00> : vector<16x288xf32>
    %44 = tpu.matmul %43, %41, %cst_28 {dimension_numbers = #tpu.dot_dimension_numbers<[1], [0], [0], [1], [0, 0, 1, 1], [], []>} : vector<16x4xbf16>, vector<4x288xbf16>, vector<16x288xf32> -> vector<16x288xf32>
    %45 = arith.addf %40, %44 : vector<16x288xf32>
    %c0_29 = arith.constant 0 : index
    %c0_30 = arith.constant 0 : index
    %46 = vector.load %arg4[%c0_29, %c0_30] : memref<16x1xf32, #tpu.memory_space<vmem>>, vector<16x1xf32>
    %47 = vector.broadcast %46 : vector<16x1xf32> to vector<16x288xf32>
    %48 = arith.addf %45, %47 : vector<16x288xf32>
    %c0_31 = arith.constant 0 : index
    %c0_32 = arith.constant 0 : index
    %49 = vector.load %arg7[%c0_31, %c0_32] : memref<1x288xf32, #tpu.memory_space<vmem>>, vector<1x288xf32>
    %c0_33 = arith.constant 0 : index
    %c0_34 = arith.constant 0 : index
    %50 = vector.load %arg8[%c0_33, %c0_34] : memref<16x16xf32, #tpu.memory_space<vmem>>, vector<16x16xf32>
    %51 = vector.broadcast %49 : vector<1x288xf32> to vector<16x288xf32>
    %52 = arith.mulf %48, %51 : vector<16x288xf32>
    %cst_35 = arith.constant dense<0.000000e+00> : vector<16xf32>
    %53 = vector.multi_reduction <add>, %52, %cst_35 [1] : vector<16x288xf32> to vector<16xf32>
    %54 = vector.shape_cast %53 : vector<16xf32> to vector<16x1xf32>
    %cst_36 = arith.constant dense<0.000000e+00> : vector<16x1xf32>
    %55 = tpu.matmul %50, %54, %cst_36 {dimension_numbers = #tpu.dot_dimension_numbers<[1], [0], [0], [1], [0, 0, 1, 1], [], []>} : vector<16x16xf32>, vector<16x1xf32>, vector<16x1xf32> -> vector<16x1xf32>
    %cst_37 = arith.constant 9.765625E-4 : f32
    %56 = vector.broadcast %cst_37 : f32 to vector<16x1xf32>
    %57 = arith.mulf %55, %56 : vector<16x1xf32>
    %58 = vector.broadcast %57 : vector<16x1xf32> to vector<16x288xf32>
    %59 = arith.subf %48, %58 : vector<16x288xf32>
    %60 = arith.mulf %59, %59 : vector<16x288xf32>
    %61 = vector.broadcast %49 : vector<1x288xf32> to vector<16x288xf32>
    %62 = arith.mulf %60, %61 : vector<16x288xf32>
    %cst_38 = arith.constant dense<0.000000e+00> : vector<16xf32>
    %63 = vector.multi_reduction <add>, %62, %cst_38 [1] : vector<16x288xf32> to vector<16xf32>
    %64 = vector.shape_cast %63 : vector<16xf32> to vector<16x1xf32>
    %cst_39 = arith.constant dense<0.000000e+00> : vector<16x1xf32>
    %65 = tpu.matmul %50, %64, %cst_39 {dimension_numbers = #tpu.dot_dimension_numbers<[1], [0], [0], [1], [0, 0, 1, 1], [], []>} : vector<16x16xf32>, vector<16x1xf32>, vector<16x1xf32> -> vector<16x1xf32>
    %cst_40 = arith.constant 9.765625E-4 : f32
    %66 = vector.broadcast %cst_40 : f32 to vector<16x1xf32>
    %67 = arith.mulf %65, %66 : vector<16x1xf32>
    %cst_41 = arith.constant 9.99999974E-6 : f32
    %68 = vector.broadcast %cst_41 : f32 to vector<16x1xf32>
    %69 = arith.addf %67, %68 : vector<16x1xf32>
    %70 = math.rsqrt %69 : vector<16x1xf32>
    %71 = vector.broadcast %70 : vector<16x1xf32> to vector<16x288xf32>
    %72 = arith.mulf %59, %71 : vector<16x288xf32>
    %c0_42 = arith.constant 0 : index
    %c0_43 = arith.constant 0 : index
    %c0_44 = arith.constant 0 : index
    %73 = vector.load %arg5[%c0_42, %c0_43, %c0_44] : memref<1x16x1xf32, #tpu.memory_space<vmem>>, vector<1x16x1xf32>
    %74 = vector.shape_cast %73 : vector<1x16x1xf32> to vector<16x1xf32>
    %75 = vector.broadcast %74 : vector<16x1xf32> to vector<16x288xf32>
    %76 = arith.mulf %72, %75 : vector<16x288xf32>
    %c0_45 = arith.constant 0 : index
    %c0_46 = arith.constant 0 : index
    %c0_47 = arith.constant 0 : index
    %77 = vector.load %arg6[%c0_45, %c0_46, %c0_47] : memref<1x16x1xf32, #tpu.memory_space<vmem>>, vector<1x16x1xf32>
    %78 = vector.shape_cast %77 : vector<1x16x1xf32> to vector<16x1xf32>
    %79 = vector.broadcast %78 : vector<16x1xf32> to vector<16x288xf32>
    %80 = arith.addf %76, %79 : vector<16x288xf32>
    %81 = arith.negf %80 : vector<16x288xf32>
    %82 = math.exp %81 : vector<16x288xf32>
    %cst_48 = arith.constant 1.000000e+00 : f32
    %83 = vector.broadcast %cst_48 : f32 to vector<16x288xf32>
    %84 = arith.addf %83, %82 : vector<16x288xf32>
    %85 = arith.divf %83, %84 : vector<16x288xf32>
    %86 = arith.mulf %80, %85 : vector<16x288xf32>
    %c0_49 = arith.constant 0 : index
    %c0_50 = arith.constant 0 : index
    %c0_51 = arith.constant 0 : index
    %87 = vector.load %arg9[%c0_49, %c0_50, %c0_51] : memref<1x16x288xf32, #tpu.memory_space<vmem>>, vector<1x16x288xf32>
    %88 = vector.shape_cast %87 : vector<1x16x288xf32> to vector<16x288xf32>
    %89 = vector.shape_cast %86 : vector<16x288xf32> to vector<1x16x288xf32>
    tpu.vector_store %arg9[%c0_49, %c0_50, %c0_51], %89 {strides = array<i32>} : memref<1x16x288xf32, #tpu.memory_space<vmem>>, vector<1x16x288xf32>,
    return
  }
  func.func @transform_0(%arg0: i32, %arg1: i32) -> (i32, i32, i32) {
    %c0_i32 = arith.constant 0 : i32
    %c0_i32_0 = arith.constant 0 : i32
    %c0_i32_1 = arith.constant 0 : i32
    return %arg0, %c0_i32, %c0_i32_0 : i32, i32, i32
  }
  func.func @transform_1(%arg0: i32, %arg1: i32) -> (i32, i32, i32) {
    %c0_i32 = arith.constant 0 : i32
    %c0_i32_0 = arith.constant 0 : i32
    %c0_i32_1 = arith.constant 0 : i32
    return %c0_i32, %arg1, %c0_i32_0 : i32, i32, i32
  }
  func.func @transform_2(%arg0: i32, %arg1: i32) -> (i32, i32) {
    %c0_i32 = arith.constant 0 : i32
    %c0_i32_0 = arith.constant 0 : i32
    return %arg1, %c0_i32 : i32, i32
  }
  func.func @transform_3(%arg0: i32, %arg1: i32) -> (i32, i32, i32) {
    %c0_i32 = arith.constant 0 : i32
    %c0_i32_0 = arith.constant 0 : i32
    return %arg0, %arg1, %c0_i32 : i32, i32, i32
  }
  func.func @transform_4(%arg0: i32, %arg1: i32) -> (i32, i32, i32) {
    %c0_i32 = arith.constant 0 : i32
    %c0_i32_0 = arith.constant 0 : i32
    return %arg0, %arg1, %c0_i32 : i32, i32, i32
  }
  func.func @transform_5(%arg0: i32, %arg1: i32) -> (i32, i32) {
    %c0_i32 = arith.constant 0 : i32
    %c0_i32_0 = arith.constant 0 : i32
    %c0_i32_1 = arith.constant 0 : i32
    return %c0_i32, %c0_i32_0 : i32, i32
  }
  func.func @transform_6(%arg0: i32, %arg1: i32) -> (i32, i32) {
    %c0_i32 = arith.constant 0 : i32
    %c0_i32_0 = arith.constant 0 : i32
    %c0_i32_1 = arith.constant 0 : i32
    return %c0_i32, %c0_i32_0 : i32, i32
  }
  func.func @transform_7(%arg0: i32, %arg1: i32) -> (i32, i32, i32) {
    %c0_i32 = arith.constant 0 : i32
    %c0_i32_0 = arith.constant 0 : i32
    return %arg0, %arg1, %c0_i32 : i32, i32, i32
  }
}

</mosaic_0001>

<llo_original>
// kernel: tpu_custom_call.1
$region0: #{tpu_custom_call.1}
  #allocation0 [shape = 'u32[]', space=smem, size = 0x4, offset = 0x4, fixed_abs, tag = 'smem constant byte address 0x4 - core index']
  #allocation1 [shape = 'u32[72,128]{1,0:T(1,128)}', space=vmem, size = 0x9000, scoped, tag = 'internal scratch']
  %s0 = inlined_call_operand.vmem [shape: bf16[2,4,326], index: 0, kind: input, shape index: {}]
  %s1 = inlined_call_operand.vmem [shape: bf16[9,32,4], index: 1, kind: input, shape index: {}]
  %s2 = inlined_call_operand.vmem [shape: f32[32,1], index: 2, kind: input, shape index: {}]
  %s3 = inlined_call_operand.vmem [shape: f32[2,32,1], index: 3, kind: input, shape index: {}]
  %s4 = inlined_call_operand.vmem [shape: f32[2,32,1], index: 4, kind: input, shape index: {}]
  %s5 = inlined_call_operand.vmem [shape: f32[1,288], index: 5, kind: input, shape index: {}]
  %s6 = inlined_call_operand.vmem [shape: f32[16,16], index: 6, kind: input, shape index: {}]
  %s7 = inlined_call_operand.hbm [shape: f32[2,32,288], index: 7, kind: output, shape index: {}]
  %s8 = sld [smem:[#allocation0]]
  $region102: #{tpu_custom_call.1} parent=0
    _
  %s10 = ssub.s32 1, %s8
  %s11 = scalar_select 0, %s10, %s8
  $region1: #{tpu_custom_call.1} parent=0
    #allocation2 [shape = 'u8[73728]{0}', space=vmem, size = 0x12000, scoped, tag = 'input window, operand 1']
    #allocation3 [shape = 'u8[49152]{0}', space=vmem, size = 0xc000, scoped, tag = 'output window, operand 0']
    #allocation4 [shape = 's32[2]{0}', space=sflag, size = 0x8, scoped, tag = 'scoped memory for tpu_custom_call.1']
    %12 = vsyncpa [#allocation4], 0
    %s13 = scalar_lea.sflag [#allocation4], 1
    %14 = vsyncpa %s13, 0
    loop: start=0, step=1, limit=6
    $region2: #{tpu_custom_call.1} parent=1 // loop_pre_header
      _
    $region3: #{tpu_custom_call.1} parent=1 // loop_header
      %s16 = sphi 0, %s20
      %p17 = scmp.ge.s32.totalorder %s16, 6
      %s23 = sphi 0, %s35
      %s24 = sphi 0, %s31
      %s25 = sphi 0, %s23
      %s26 = sphi 0, %s24
      %s27 = sphi 0, %s25
      %s28 = sphi 0, %s26
      %s38 = sphi 0, %s40
      %s41 = sphi 0, %s38
      %s42 = sphi 0, %s41
      %s58 = sphi 0, %s42
      %s64 = sphi 0, %s66
      %s67 = sphi 0, %s64
      %s68 = sphi 0, %s67
      %s84 = sphi 0, %s68
      %s90 = sphi 0, %s92
      %s93 = sphi 0, %s90
      %s94 = sphi 0, %s93
      %s110 = sphi 0, %s94
      %s118 = sphi 0, %s120
      %s121 = sphi 0, %s118
      %s122 = sphi 0, %s121
      %s138 = sphi 0, %s122
      %s146 = sphi 0, %s148
      %s149 = sphi 0, %s146
      %s150 = sphi 0, %s149
      %s166 = sphi 0, %s150
      %s170 = sphi 0, %s170
      %s172 = sphi 0, %s170
      %s173 = sphi 0, %s172
      %s187 = sphi 0, %s173
      %s191 = sphi 0, %s191
      %s193 = sphi 0, %s191
      %s194 = sphi 0, %s193
      %s208 = sphi 0, %s194
      %s216 = sphi 0, %s218
      %s219 = sphi 0, %s216
      %s220 = sphi 0, %s219
      %s236 = sphi 0, %s220
    $region4: #{tpu_custom_call.1} parent=1 // loop_header_branch
      %19 = sbr.rel (%p17) target = $region8
    $region5: #{tpu_custom_call.1} parent=1 // loop_body
      %s21 = ssub.s32 %s16, 1
      %s22 = ssub.s32 %s16, 2
      %s29 = sadd.s32 1, %s24
      %p30 = scmp.ge.s32.totalorder %s29, 2
      %s31 = scalar_select %p30, 0, %s29
      %s32 = sadd.s32 1, %s23
      %s33 = scalar_select %p30, %s32, %s23
      %p34 = scmp.ge.s32.totalorder %s33, 2
      %s35 = scalar_select %p34, 0, %s33
      %s36 = ssub.s32 %s23, %s35
      %p37 = scmp.eq.s32.totalorder %s36, 0
      %s39 = sadd.s32 %s38, 1
      %s40 = scalar_select %p37, %s38, %s39
      %p43 = pneg %p37
      %p44 = scmp.eq.s32.totalorder %s16, 3
      %p45 = por %p43, %p44
      %p46 = scmp.ne.s32.totalorder %s38, %s41
      %p47 = scmp.eq.s32.totalorder %s16, 0
      %p48 = por %p46, %p47
      %p49 = scmp.ne.s32.totalorder %s38, %s41
      %p50 = scmp.eq.s32.totalorder %s21, 3
      %p51 = por %p49, %p50
      %p52 = scmp.ne.s32.totalorder %s41, %s42
      %p53 = scmp.eq.s32.totalorder %s21, 0
      %p54 = por %p52, %p53
      %p55 = scmp.ne.s32.totalorder %s41, %s42
      %p56 = scmp.eq.s32.totalorder %s22, 3
      %p57 = por %p55, %p56
      %p59 = scmp.ne.s32.totalorder %s42, %s58
      %p60 = scmp.eq.s32.totalorder %s22, 0
      %p61 = por %p59, %p60
      %s62 = ssub.s32 %s24, %s31
      %p63 = scmp.eq.s32.totalorder %s62, 0
      %s65 = sadd.s32 %s64, 1
      %s66 = scalar_select %p63, %s64, %s65
      %p69 = pneg %p63
      %p70 = scmp.eq.s32.totalorder %s16, 3
      %p71 = por %p69, %p70
      %p72 = scmp.ne.s32.totalorder %s64, %s67
      %p73 = scmp.eq.s32.totalorder %s16, 0
      %p74 = por %p72, %p73
      %p75 = scmp.ne.s32.totalorder %s64, %s67
      %p76 = scmp.eq.s32.totalorder %s21, 3
      %p77 = por %p75, %p76
      %p78 = scmp.ne.s32.totalorder %s67, %s68
      %p79 = scmp.eq.s32.totalorder %s21, 0
      %p80 = por %p78, %p79
      %p81 = scmp.ne.s32.totalorder %s67, %s68
      %p82 = scmp.eq.s32.totalorder %s22, 3
      %p83 = por %p81, %p82
      %p85 = scmp.ne.s32.totalorder %s68, %s84
      %p86 = scmp.eq.s32.totalorder %s22, 0
      %p87 = por %p85, %p86
      %s88 = ssub.s32 %s24, %s31
      %p89 = scmp.eq.s32.totalorder %s88, 0
      %s91 = sadd.s32 %s90, 1
      %s92 = scalar_select %p89, %s90, %s91
      %p95 = pneg %p89
      %p96 = scmp.eq.s32.totalorder %s16, 3
      %p97 = por %p95, %p96
      %p98 = scmp.ne.s32.totalorder %s90, %s93
      %p99 = scmp.eq.s32.totalorder %s16, 0
      %p100 = por %p98, %p99
      %p101 = scmp.ne.s32.totalorder %s90, %s93
      %p102 = scmp.eq.s32.totalorder %s21, 3
      %p103 = por %p101, %p102
      %p104 = scmp.ne.s32.totalorder %s93, %s94
      %p105 = scmp.eq.s32.totalorder %s21, 0
      %p106 = por %p104, %p105
      %p107 = scmp.ne.s32.totalorder %s93, %s94
      %p108 = scmp.eq.s32.totalorder %s22, 3
      %p109 = por %p107, %p108
      %p111 = scmp.ne.s32.totalorder %s94, %s110
      %p112 = scmp.eq.s32.totalorder %s22, 0
      %p113 = por %p111, %p112
      %s114 = ssub.s32 %s23, %s35
      %s115 = ssub.s32 %s24, %s31
      %s116 = sor.u32 %s114, %s115
      %p117 = scmp.eq.s32.totalorder %s116, 0
      %s119 = sadd.s32 %s118, 1
      %s120 = scalar_select %p117, %s118, %s119
      %p123 = pneg %p117
      %p124 = scmp.eq.s32.totalorder %s16, 3
      %p125 = por %p123, %p124
      %p126 = scmp.ne.s32.totalorder %s118, %s121
      %p127 = scmp.eq.s32.totalorder %s16, 0
      %p128 = por %p126, %p127
      %p129 = scmp.ne.s32.totalorder %s118, %s121
      %p130 = scmp.eq.s32.totalorder %s21, 3
      %p131 = por %p129, %p130
      %p132 = scmp.ne.s32.totalorder %s121, %s122
      %p133 = scmp.eq.s32.totalorder %s21, 0
      %p134 = por %p132, %p133
      %p135 = scmp.ne.s32.totalorder %s121, %s122
      %p136 = scmp.eq.s32.totalorder %s22, 3
      %p137 = por %p135, %p136
      %p139 = scmp.ne.s32.totalorder %s122, %s138
      %p140 = scmp.eq.s32.totalorder %s22, 0
      %p141 = por %p139, %p140
      %s142 = ssub.s32 %s23, %s35
      %s143 = ssub.s32 %s24, %s31
      %s144 = sor.u32 %s142, %s143
      %p145 = scmp.eq.s32.totalorder %s144, 0
      %s147 = sadd.s32 %s146, 1
      %s148 = scalar_select %p145, %s146, %s147
      %p151 = pneg %p145
      %p152 = scmp.eq.s32.totalorder %s16, 3
      %p153 = por %p151, %p152
      %p154 = scmp.ne.s32.totalorder %s146, %s149
      %p155 = scmp.eq.s32.totalorder %s16, 0
      %p156 = por %p154, %p155
      %p157 = scmp.ne.s32.totalorder %s146, %s149
      %p158 = scmp.eq.s32.totalorder %s21, 3
      %p159 = por %p157, %p158
      %p160 = scmp.ne.s32.totalorder %s149, %s150
      %p161 = scmp.eq.s32.totalorder %s21, 0
      %p162 = por %p160, %p161
      %p163 = scmp.ne.s32.totalorder %s149, %s150
      %p164 = scmp.eq.s32.totalorder %s22, 3
      %p165 = por %p163, %p164
      %p167 = scmp.ne.s32.totalorder %s150, %s166
      %p168 = scmp.eq.s32.totalorder %s22, 0
      %p169 = por %p167, %p168
      %s171 = sadd.s32 %s170, 1
      %p174 = scmp.eq.s32.totalorder %s16, 3
      %p175 = scmp.ne.s32.totalorder %s170, %s172
      %p176 = scmp.eq.s32.totalorder %s16, 0
      %p177 = por %p175, %p176
      %p178 = scmp.ne.s32.totalorder %s170, %s172
      %p179 = scmp.eq.s32.totalorder %s21, 3
      %p180 = por %p178, %p179
      %p181 = scmp.ne.s32.totalorder %s172, %s173
      %p182 = scmp.eq.s32.totalorder %s21, 0
      %p183 = por %p181, %p182
      %p184 = scmp.ne.s32.totalorder %s172, %s173
      %p185 = scmp.eq.s32.totalorder %s22, 3
      %p186 = por %p184, %p185
      %p188 = scmp.ne.s32.totalorder %s173, %s187
      %p189 = scmp.eq.s32.totalorder %s22, 0
      %p190 = por %p188, %p189
      %s192 = sadd.s32 %s191, 1
      %p195 = scmp.eq.s32.totalorder %s16, 3
      %p196 = scmp.ne.s32.totalorder %s191, %s193
      %p197 = scmp.eq.s32.totalorder %s16, 0
      %p198 = por %p196, %p197
      %p199 = scmp.ne.s32.totalorder %s191, %s193
      %p200 = scmp.eq.s32.totalorder %s21, 3
      %p201 = por %p199, %p200
      %p202 = scmp.ne.s32.totalorder %s193, %s194
      %p203 = scmp.eq.s32.totalorder %s21, 0
      %p204 = por %p202, %p203
      %p205 = scmp.ne.s32.totalorder %s193, %s194
      %p206 = scmp.eq.s32.totalorder %s22, 3
      %p207 = por %p205, %p206
      %p209 = scmp.ne.s32.totalorder %s194, %s208
      %p210 = scmp.eq.s32.totalorder %s22, 0
      %p211 = por %p209, %p210
      %s212 = ssub.s32 %s23, %s35
      %s213 = ssub.s32 %s24, %s31
      %s214 = sor.u32 %s212, %s213
      %p215 = scmp.eq.s32.totalorder %s214, 0
      %s217 = sadd.s32 %s216, 1
      %s218 = scalar_select %p215, %s216, %s217
      %p221 = pneg %p215
      %p222 = scmp.eq.s32.totalorder %s16, 3
      %p223 = por %p221, %p222
      %p224 = scmp.ne.s32.totalorder %s216, %s219
      %p225 = scmp.eq.s32.totalorder %s16, 0
      %p226 = por %p224, %p225
      %p227 = scmp.ne.s32.totalorder %s216, %s219
      %p228 = scmp.eq.s32.totalorder %s21, 3
      %p229 = por %p227, %p228
      %p230 = scmp.ne.s32.totalorder %s219, %s220
      %p231 = scmp.eq.s32.totalorder %s21, 0
      %p232 = por %p230, %p231
      %p233 = scmp.ne.s32.totalorder %s219, %s220
      %p234 = scmp.eq.s32.totalorder %s22, 3
      %p235 = por %p233, %p234
      %p237 = scmp.ne.s32.totalorder %s220, %s236
      %p238 = scmp.eq.s32.totalorder %s22, 0
      %p239 = por %p237, %p238
      %p240 = scmp.le.s32.totalorder 1, %s16
      %p241 = scmp.lt.s32.totalorder %s16, 5
      %p242 = pnand %p240, %p241
      %p243 = pneg %p242
      // Predicated region
      $region9: #{tpu_custom_call.1} parent=5 // pred_check
        _
      $region10: #{tpu_custom_call.1} parent=5 // pred_check_branch
        %245 = sbr.rel (%p242) target = $region12
      $region11: #{tpu_custom_call.1} parent=5 // pred_region
        %s246 = ssub.s32 %s16, 1
        // Predicated region
        $region13: #{tpu_custom_call.1} parent=11 // pred_check
          %p247 = pneg %p183
        $region14: #{tpu_custom_call.1} parent=11 // pred_check_branch
          %249 = sbr.rel (%p247) target = $region16
        $region15: #{tpu_custom_call.1} parent=11 // pred_region
          _
        $region16: #{tpu_custom_call.1} parent=11 // pred_fallthru
          _
        // Predicated region
        $region17: #{tpu_custom_call.1} parent=11 // pred_check
          %p250 = pneg %p204
        $region18: #{tpu_custom_call.1} parent=11 // pred_check_branch
          %252 = sbr.rel (%p250) target = $region20
        $region19: #{tpu_custom_call.1} parent=11 // pred_region
          _
        $region20: #{tpu_custom_call.1} parent=11 // pred_fallthru
          _
      $region12: #{tpu_custom_call.1} parent=5 // pred_fallthru
        _
      %p253 = scmp.lt.s32.totalorder %s16, 4
      // Predicated region
      $region21: #{tpu_custom_call.1} parent=5 // pred_check
        %p254 = pneg %p253
      $region22: #{tpu_custom_call.1} parent=5 // pred_check_branch
        %256 = sbr.rel (%p254) target = $region24
      $region23: #{tpu_custom_call.1} parent=5 // pred_region
        // Predicated region
        $region25: #{tpu_custom_call.1} parent=23 // pred_check
          %p257 = pneg %p48
        $region26: #{tpu_custom_call.1} parent=23 // pred_check_branch
          %259 = sbr.rel (%p257) target = $region28
        $region27: #{tpu_custom_call.1} parent=23 // pred_region
          %p260 = scmp.lt.s32.totalorder %s23, 1
          %s261 = scalar_select %p260, %s23, 1
          %s262 = smul.addr %s261, 3
          %s263 = smul.addr %s262, 2
          %s264 = scalar_lea.vmem %s0, %s263
        $region28: #{tpu_custom_call.1} parent=23 // pred_fallthru
          _
        // Predicated region
        $region29: #{tpu_custom_call.1} parent=23 // pred_check
          %p265 = pneg %p74
        $region30: #{tpu_custom_call.1} parent=23 // pred_check_branch
          %267 = sbr.rel (%p265) target = $region32
        $region31: #{tpu_custom_call.1} parent=23 // pred_region
          %s268 = sand.u32 %s64, 1
          %s269 = sand.u32 %s64, 1
          %s270 = smul.addr %s269, 72
          %s271 = scalar_lea.vmem [#allocation2], %s270
          %s272 = smul.u32 2, %s24
          %s273 = smul.addr %s272, 4
          %s274 = scalar_lea.vmem %s1, %s273
          // Predicated region
          $region33: #{tpu_custom_call.1} parent=31 // pred_check
            _
          $region34: #{tpu_custom_call.1} parent=31 // pred_check_branch
            %276 = sbr.rel (0) target = $region36
          $region35: #{tpu_custom_call.1} parent=31 // pred_region
            // Predicated region
            $region37: #{tpu_custom_call.1} parent=35 // pred_check
              _
            $region38: #{tpu_custom_call.1} parent=35 // pred_check_branch
              %278 = sbr.rel target = $region40
            $region39: #{tpu_custom_call.1} parent=35 // pred_region
              // Predicated region
              $region52: #{tpu_custom_call.1} parent=39 // pred_check
                _
              $region53: #{tpu_custom_call.1} parent=39 // pred_check_branch
                %328 = sbr.rel (0) target = $region55
              $region54: #{tpu_custom_call.1} parent=39 // pred_region
                loop: start=0, step=1, limit=1
                $region56: #{tpu_custom_call.1} parent=54 // loop_pre_header
                  _
                $region57: #{tpu_custom_call.1} parent=54 // loop_header
                  %s330 = sphi 0, %s334
                  %p331 = scmp.ge.s32.totalorder %s330, 1
                  %s335 = sphi %s274, %s274
                  %s336 = sphi %s271, %s271
                $region58: #{tpu_custom_call.1} parent=54 // loop_header_branch
                  %333 = sbr.rel (%p331) target = $region62
                $region59: #{tpu_custom_call.1} parent=54 // loop_body
                  _
                $region60: #{tpu_custom_call.1} parent=54 // loop_footer
                  %s334 = sadd.s32 1, %s330
                $region61: #{tpu_custom_call.1} parent=54 // loop_footer_branch
                  %329 = sbr.rel target = $region57
                $region62: #{tpu_custom_call.1} parent=54 // loop_exit
                  _
                %s338 = ssub.s32 16, 1
                loop: start=0, step=1, limit=1
                $region63: #{tpu_custom_call.1} parent=54 // loop_pre_header
                  _
                $region64: #{tpu_custom_call.1} parent=54 // loop_header
                  %s340 = sphi 0, %s344
                  %p341 = scmp.ge.s32.totalorder %s340, 1
                  %s345 = sphi %s274, %s274
                  %s346 = sphi %s271, %s271
                $region65: #{tpu_custom_call.1} parent=54 // loop_header_branch
                  %343 = sbr.rel (%p341) target = $region69
                $region66: #{tpu_custom_call.1} parent=54 // loop_body
                  %v347 = vld [vmem:[%s345] sm:%s338]
                  %348 = vst [vmem:[%s346] sm:%s338] %v347
                  %v349 = vld [vmem:[%s345 + $0x4] sm:%s338]
                  %350 = vst [vmem:[%s346 + $0x4] sm:%s338] %v349
                  %v351 = vld [vmem:[%s345 + $0x10] sm:%s338]
                  %352 = vst [vmem:[%s346 + $0x8] sm:%s338] %v351
                  %v353 = vld [vmem:[%s345 + $0x14] sm:%s338]
                  %354 = vst [vmem:[%s346 + $0xc] sm:%s338] %v353
                  %v355 = vld [vmem:[%s345 + $0x20] sm:%s338]
                  %356 = vst [vmem:[%s346 + $0x10] sm:%s338] %v355
                  %v357 = vld [vmem:[%s345 + $0x24] sm:%s338]
                  %358 = vst [vmem:[%s346 + $0x14] sm:%s338] %v357
                  %v359 = vld [vmem:[%s345 + $0x30] sm:%s338]
                  %360 = vst [vmem:[%s346 + $0x18] sm:%s338] %v359
                  %v361 = vld [vmem:[%s345 + $0x34] sm:%s338]
                  %362 = vst [vmem:[%s346 + $0x1c] sm:%s338] %v361
                  %v363 = vld [vmem:[%s345 + $0x40] sm:%s338]
                  %364 = vst [vmem:[%s346 + $0x20] sm:%s338] %v363
                  %v365 = vld [vmem:[%s345 + $0x44] sm:%s338]
                  %366 = vst [vmem:[%s346 + $0x24] sm:%s338] %v365
                  %v367 = vld [vmem:[%s345 + $0x50] sm:%s338]
                  %368 = vst [vmem:[%s346 + $0x28] sm:%s338] %v367
                  %v369 = vld [vmem:[%s345 + $0x54] sm:%s338]
                  %370 = vst [vmem:[%s346 + $0x2c] sm:%s338] %v369
                  %v371 = vld [vmem:[%s345 + $0x60] sm:%s338]
                  %372 = vst [vmem:[%s346 + $0x30] sm:%s338] %v371
                  %v373 = vld [vmem:[%s345 + $0x64] sm:%s338]
                  %374 = vst [vmem:[%s346 + $0x34] sm:%s338] %v373
                  %v375 = vld [vmem:[%s345 + $0x70] sm:%s338]
                  %376 = vst [vmem:[%s346 + $0x38] sm:%s338] %v375
                  %v377 = vld [vmem:[%s345 + $0x74] sm:%s338]
                  %378 = vst [vmem:[%s346 + $0x3c] sm:%s338] %v377
                  %v379 = vld [vmem:[%s345 + $0x80] sm:%s338]
                  %380 = vst [vmem:[%s346 + $0x40] sm:%s338] %v379
                  %v381 = vld [vmem:[%s345 + $0x84] sm:%s338]
                  %382 = vst [vmem:[%s346 + $0x44] sm:%s338] %v381
                $region67: #{tpu_custom_call.1} parent=54 // loop_footer
                  %s344 = sadd.s32 1, %s340
                $region68: #{tpu_custom_call.1} parent=54 // loop_footer_branch
                  %339 = sbr.rel target = $region64
                $region69: #{tpu_custom_call.1} parent=54 // loop_exit
                  _
              $region55: #{tpu_custom_call.1} parent=39 // pred_fallthru
                _
            $region40: #{tpu_custom_call.1} parent=35 // pred_fallthru
              _
            // Predicated region
            $region41: #{tpu_custom_call.1} parent=35 // pred_check
              _
            $region42: #{tpu_custom_call.1} parent=35 // pred_check_branch
              %280 = sbr.rel (0) target = $region44
            $region43: #{tpu_custom_call.1} parent=35 // pred_region
              %s282 = ssub.s32 16, 1
              loop: start=0, step=1, limit=1
              $region45: #{tpu_custom_call.1} parent=43 // loop_pre_header
                _
              $region46: #{tpu_custom_call.1} parent=43 // loop_header
                %s284 = sphi 0, %s288
                %p285 = scmp.ge.s32.totalorder %s284, 1
                %s289 = sphi %s274, %s274
                %s290 = sphi %s271, %s271
              $region47: #{tpu_custom_call.1} parent=43 // loop_header_branch
                %287 = sbr.rel (%p285) target = $region51
              $region48: #{tpu_custom_call.1} parent=43 // loop_body
                %v291 = vld [vmem:[%s289] sm:%s282]
                %292 = vst [vmem:[%s290] sm:%s282] %v291
                %v293 = vld [vmem:[%s289 + $0x4] sm:%s282]
                %294 = vst [vmem:[%s290 + $0x4] sm:%s282] %v293
                %v295 = vld [vmem:[%s289 + $0x10] sm:%s282]
                %296 = vst [vmem:[%s290 + $0x8] sm:%s282] %v295
                %v297 = vld [vmem:[%s289 + $0x14] sm:%s282]
                %298 = vst [vmem:[%s290 + $0xc] sm:%s282] %v297
                %v299 = vld [vmem:[%s289 + $0x20] sm:%s282]
                %300 = vst [vmem:[%s290 + $0x10] sm:%s282] %v299
                %v301 = vld [vmem:[%s289 + $0x24] sm:%s282]
                %302 = vst [vmem:[%s290 + $0x14] sm:%s282] %v301
                %v303 = vld [vmem:[%s289 + $0x30] sm:%s282]
                %304 = vst [vmem:[%s290 + $0x18] sm:%s282] %v303
                %v305 = vld [vmem:[%s289 + $0x34] sm:%s282]
                %306 = vst [vmem:[%s290 + $0x1c] sm:%s282] %v305
                %v307 = vld [vmem:[%s289 + $0x40] sm:%s282]
                %308 = vst [vmem:[%s290 + $0x20] sm:%s282] %v307
                %v309 = vld [vmem:[%s289 + $0x44] sm:%s282]
                %310 = vst [vmem:[%s290 + $0x24] sm:%s282] %v309
                %v311 = vld [vmem:[%s289 + $0x50] sm:%s282]
                %312 = vst [vmem:[%s290 + $0x28] sm:%s282] %v311
                %v313 = vld [vmem:[%s289 + $0x54] sm:%s282]
                %314 = vst [vmem:[%s290 + $0x2c] sm:%s282] %v313
                %v315 = vld [vmem:[%s289 + $0x60] sm:%s282]
                %316 = vst [vmem:[%s290 + $0x30] sm:%s282] %v315
                %v317 = vld [vmem:[%s289 + $0x64] sm:%s282]
                %318 = vst [vmem:[%s290 + $0x34] sm:%s282] %v317
                %v319 = vld [vmem:[%s289 + $0x70] sm:%s282]
                %320 = vst [vmem:[%s290 + $0x38] sm:%s282] %v319
                %v321 = vld [vmem:[%s289 + $0x74] sm:%s282]
                %322 = vst [vmem:[%s290 + $0x3c] sm:%s282] %v321
                %v323 = vld [vmem:[%s289 + $0x80] sm:%s282]
                %324 = vst [vmem:[%s290 + $0x40] sm:%s282] %v323
                %v325 = vld [vmem:[%s289 + $0x84] sm:%s282]
                %326 = vst [vmem:[%s290 + $0x44] sm:%s282] %v325
              $region49: #{tpu_custom_call.1} parent=43 // loop_footer
                %s288 = sadd.s32 1, %s284
              $region50: #{tpu_custom_call.1} parent=43 // loop_footer_branch
                %283 = sbr.rel target = $region46
              $region51: #{tpu_custom_call.1} parent=43 // loop_exit
                _
            $region44: #{tpu_custom_call.1} parent=35 // pred_fallthru
              _
          $region36: #{tpu_custom_call.1} parent=31 // pred_fallthru
            _
          %383 = vnop
        $region32: #{tpu_custom_call.1} parent=23 // pred_fallthru
          _
        // Predicated region
        $region70: #{tpu_custom_call.1} parent=23 // pred_check
          %p384 = pneg %p100
        $region71: #{tpu_custom_call.1} parent=23 // pred_check_branch
          %386 = sbr.rel (%p384) target = $region73
        $region72: #{tpu_custom_call.1} parent=23 // pred_region
          %s387 = smul.u32 2, %s24
          %p388 = scmp.lt.s32.totalorder %s387, 3
          %s389 = scalar_select %p388, %s387, 3
          %s390 = smul.addr %s389, 8
          %s391 = scalar_lea.vmem %s2, %s390
          %s392 = smul.u32 2, %s24
        $region73: #{tpu_custom_call.1} parent=23 // pred_fallthru
          _
        // Predicated region
        $region74: #{tpu_custom_call.1} parent=23 // pred_check
          %p393 = pneg %p128
        $region75: #{tpu_custom_call.1} parent=23 // pred_check_branch
          %395 = sbr.rel (%p393) target = $region77
        $region76: #{tpu_custom_call.1} parent=23 // pred_region
          %s396 = smul.u32 2, %s24
          %p397 = scmp.lt.s32.totalorder %s23, 1
          %s398 = scalar_select %p397, %s23, 1
          %p399 = scmp.lt.s32.totalorder %s396, 3
          %s400 = scalar_select %p399, %s396, 3
          %s401 = smul.addr %s398, 4
          %s402 = sadd.s32 %s400, %s401
          %s403 = smul.addr %s402, 8
          %s404 = scalar_lea.vmem %s3, %s403
          %s405 = smul.u32 2, %s24
        $region77: #{tpu_custom_call.1} parent=23 // pred_fallthru
          _
        // Predicated region
        $region78: #{tpu_custom_call.1} parent=23 // pred_check
          %p406 = pneg %p156
        $region79: #{tpu_custom_call.1} parent=23 // pred_check_branch
          %408 = sbr.rel (%p406) target = $region81
        $region80: #{tpu_custom_call.1} parent=23 // pred_region
          %s409 = smul.u32 2, %s24
          %p410 = scmp.lt.s32.totalorder %s23, 1
          %s411 = scalar_select %p410, %s23, 1
          %p412 = scmp.lt.s32.totalorder %s409, 3
          %s413 = scalar_select %p412, %s409, 3
          %s414 = smul.addr %s411, 4
          %s415 = sadd.s32 %s413, %s414
          %s416 = smul.addr %s415, 8
          %s417 = scalar_lea.vmem %s4, %s416
          %s418 = smul.u32 2, %s24
        $region81: #{tpu_custom_call.1} parent=23 // pred_fallthru
          _
      $region24: #{tpu_custom_call.1} parent=5 // pred_fallthru
        _
      %p419 = scmp.le.s32.totalorder 1, %s16
      %p420 = scmp.lt.s32.totalorder %s16, 5
      %p421 = pnand %p419, %p420
      %p422 = pneg %p421
      // Predicated region
      $region82: #{tpu_custom_call.1} parent=5 // pred_check
        _
      $region83: #{tpu_custom_call.1} parent=5 // pred_check_branch
        %424 = sbr.rel (%p421) target = $region85
      $region84: #{tpu_custom_call.1} parent=5 // pred_region
        %s425 = ssub.s32 %s16, 1
        %s426 = sand.u32 %s67, 1
        %s427 = sand.u32 %s67, 1
        %s428 = smul.addr %s427, 72
        %s429 = scalar_lea.vmem [#allocation2], %s428
        // Predicated region
        $region86: #{tpu_custom_call.1} parent=84 // pred_check
          %p430 = pneg %p80
        $region87: #{tpu_custom_call.1} parent=84 // pred_check_branch
          %432 = sbr.rel (%p430) target = $region89
        $region88: #{tpu_custom_call.1} parent=84 // pred_region
          _
        $region89: #{tpu_custom_call.1} parent=84 // pred_fallthru
          _
        %p433 = scmp.lt.s32.totalorder %s25, 1
        %s434 = scalar_select %p433, %s25, 1
        %s435 = smul.addr %s434, 3
        %s436 = smul.addr %s435, 2
        %s437 = scalar_lea.vmem %s0, %s436
        %p438 = pneg %p54
        %p439 = pneg %p51
        %s440 = sand.u32 %s67, 1
        %s441 = sand.u32 %s67, 1
        %s442 = smul.addr %s441, 72
        %s443 = scalar_lea.vmem [#allocation2], %s442
        %p444 = pneg %p80
        %p445 = pneg %p77
        %s446 = smul.u32 2, %s26
        %p447 = scmp.lt.s32.totalorder %s446, 3
        %s448 = scalar_select %p447, %s446, 3
        %s449 = smul.addr %s448, 8
        %s450 = scalar_lea.vmem %s2, %s449
        %p451 = pneg %p106
        %p452 = pneg %p103
        %s453 = smul.u32 2, %s26
        %p454 = scmp.lt.s32.totalorder %s25, 1
        %s455 = scalar_select %p454, %s25, 1
        %p456 = scmp.lt.s32.totalorder %s453, 3
        %s457 = scalar_select %p456, %s453, 3
        %s458 = smul.addr %s455, 4
        %s459 = sadd.s32 %s457, %s458
        %s460 = smul.addr %s459, 8
        %s461 = scalar_lea.vmem %s3, %s460
        %p462 = pneg %p134
        %p463 = pneg %p131
        %s464 = smul.u32 2, %s26
        %p465 = scmp.lt.s32.totalorder %s25, 1
        %s466 = scalar_select %p465, %s25, 1
        %p467 = scmp.lt.s32.totalorder %s464, 3
        %s468 = scalar_select %p467, %s464, 3
        %s469 = smul.addr %s466, 4
        %s470 = sadd.s32 %s468, %s469
        %s471 = smul.addr %s470, 8
        %s472 = scalar_lea.vmem %s4, %s471
        %p473 = pneg %p162
        %p474 = pneg %p159
        %p475 = pneg %p183
        %p476 = pneg %p180
        %p477 = pneg %p204
        %p478 = pneg %p201
        %p479 = pneg %p232
        %p480 = pneg %p229
        %s481 = sand.u32 %s219, 1
        %s482 = scalar_lea.sflag [#allocation4], %s481
        %s483 = sand.u32 %s219, 1
        %s484 = smul.addr %s483, 48
        %s485 = scalar_lea.vmem [#allocation3], %s484
        %p486 = scmp.lt.s32.totalorder %s25, 1
        %s487 = scalar_select %p486, %s25, 1
        %s488 = smul.addr %s487, 3
        %s489 = smul.addr %s488, 2
        %s490 = scalar_lea.vmem %s0, %s489
        %s491 = smul.u32 2, %s26
        %s492 = smul.u32 2, %s26
        %p493 = scmp.lt.s32.totalorder %s492, 3
        %s494 = scalar_select %p493, %s492, 3
        %s495 = smul.addr %s494, 8
        %s496 = scalar_lea.vmem %s2, %s495
        %s497 = smul.u32 2, %s26
        %s498 = smul.u32 2, %s26
        %p499 = scmp.lt.s32.totalorder %s25, 1
        %s500 = scalar_select %p499, %s25, 1
        %p501 = scmp.lt.s32.totalorder %s498, 3
        %s502 = scalar_select %p501, %s498, 3
        %s503 = smul.addr %s500, 4
        %s504 = sadd.s32 %s502, %s503
        %s505 = smul.addr %s504, 8
        %s506 = scalar_lea.vmem %s3, %s505
        %s507 = smul.u32 2, %s26
        %s508 = smul.u32 2, %s26
        %p509 = scmp.lt.s32.totalorder %s25, 1
        %s510 = scalar_select %p509, %s25, 1
        %p511 = scmp.lt.s32.totalorder %s508, 3
        %s512 = scalar_select %p511, %s508, 3
        %s513 = smul.addr %s510, 4
        %s514 = sadd.s32 %s512, %s513
        %s515 = smul.addr %s514, 8
        %s516 = scalar_lea.vmem %s4, %s515
        %s517 = smul.u32 2, %s26
        %s518 = smul.u32 2, %s26
        %v520 = vld [vmem:[%s490] sm:$0x3f]
        %v521 = vld [vmem:[%s429] sm:$0xf]
        %v522 = vld [vmem:[%s429 + $0x4] sm:$0xf]
        %s523 = scalar_lea.vmem %s429, 8 [#allocation2]
        %v524 = vld [vmem:[%s523] sm:$0xf]
        %v525 = vld [vmem:[%s523 + $0x4] sm:$0xf]
        %v528 = vunpack.c.l.b16 %v524
        %v529 = vunpack.c.l.b16 %v525
        %v530 = vpack.c.b16 %v529, %v528
        %532 = vst [vmem:[#allocation1] ss:$4 sm:$0xff] %v520
        %v533 = vld.sshfl [vmem:[#allocation1] sm:$0xff pattern:$0x73625140]
        %v535 = vld.sshfl [vmem:[#allocation1 + $0x8] sm:$0xff pattern:$0x73625140]
        %v537 = vld.sshfl [vmem:[#allocation1 + $0x10] sm:$0xff pattern:$0x73625140]
        %539 = vrot.lane.b32.xlu0 %v533, 127
        %v540 = vpop.permute.xlu0 %539
        %541 = vrot.lane.b32.xlu0 %v535, 127
        %v542 = vpop.permute.xlu0 %541
        %543 = vrot.lane.b32.xlu0 %v537, 127
        %v544 = vpop.permute.xlu0 %543
        %vm545 = vcmask 1039360
        %v546 = vsel %vm545, %v540, %v542
        %v547 = vsel %vm545, %v542, %v544
        %vm548 = vcmask 31744
        %v550 = vsel %vm548, %v530, 0
        %vm552 = vcmask 1041408
        %v554 = vsel %vm552, %v546, 0
        %v557 = vsel %vm552, %v547, 0
        %v560 = vsel %vm552, %v544, 0
        %562 = vmatpush.bf16.msra.mxu0 0
        %563 = vmatpush.bf16.msra.mxu0 0
        %564 = vmatpush.bf16.msra.mxu0 0
        %565 = vmatpush.bf16.msra.mxu0 0
        %566 = vmatpush.bf16.msra.mxu0 0
        %567 = vmatpush.bf16.msra.mxu0 0
        %568 = vmatpush.bf16.msra.mxu0 0
        %569 = vmatpush.bf16.msra.mxu0 %v554
        %570 = vmatmul.bf16.gmra.mxu0 %v550
        %v571 = vpop.f32.mrf.mxu0
        %v572 = vadd.f32 0.0, %v571
        %v573 = vpop.f32.mrf.mxu0
        %v574 = vadd.f32 0.0, %v573
        %575 = vdwg.mxu0
        %576 = vmatpush.bf16.msra.mxu0 0
        %577 = vmatpush.bf16.msra.mxu0 0
        %578 = vmatpush.bf16.msra.mxu0 0
        %579 = vmatpush.bf16.msra.mxu0 0
        %580 = vmatpush.bf16.msra.mxu0 0
        %581 = vmatpush.bf16.msra.mxu0 0
        %582 = vmatpush.bf16.msra.mxu0 0
        %583 = vmatpush.bf16.msra.mxu0 %v557
        %584 = vmatmul.bf16.gmra.mxu0 %v550
        %v585 = vpop.f32.mrf.mxu0
        %v586 = vadd.f32 0.0, %v585
        %v587 = vpop.f32.mrf.mxu0
        %v588 = vadd.f32 0.0, %v587
        %589 = vdwg.mxu0
        %590 = vmatpush.bf16.msra.mxu0 0
        %591 = vmatpush.bf16.msra.mxu0 0
        %592 = vmatpush.bf16.msra.mxu0 0
        %593 = vmatpush.bf16.msra.mxu0 0
        %594 = vmatpush.bf16.msra.mxu0 0
        %595 = vmatpush.bf16.msra.mxu0 0
        %596 = vmatpush.bf16.msra.mxu0 0
        %597 = vmatpush.bf16.msra.mxu0 %v560
        %598 = vmatmul.bf16.gmra.mxu0 %v550
        %v599 = vpop.f32.mrf.mxu0
        %v600 = vadd.f32 0.0, %v599
        %v601 = vpop.f32.mrf.mxu0
        %v602 = vadd.f32 0.0, %v601
        %603 = vdwg.mxu0
        %v606 = vunpack.c.l.b16 %v521
        %v607 = vunpack.c.l.b16 %v522
        %v608 = vpack.c.b16 %v607, %v606
        %609 = vst [vmem:[#allocation1] ss:$4 sm:$0xff] %v520
        %v610 = vld.sshfl [vmem:[#allocation1] sm:$0xff pattern:$0x73625140]
        %v611 = vld.sshfl [vmem:[#allocation1 + $0x8] sm:$0xff pattern:$0x73625140]
        %v612 = vld.sshfl [vmem:[#allocation1 + $0x10] sm:$0xff pattern:$0x73625140]
        %v614 = vsel %vm548, %v608, 0
        %v616 = vsel %vm552, %v610, 0
        %v618 = vsel %vm552, %v611, 0
        %v620 = vsel %vm552, %v612, 0
        %622 = vmatpush.bf16.msra.mxu0 0
        %623 = vmatpush.bf16.msra.mxu0 0
        %624 = vmatpush.bf16.msra.mxu0 0
        %625 = vmatpush.bf16.msra.mxu0 0
        %626 = vmatpush.bf16.msra.mxu0 0
        %627 = vmatpush.bf16.msra.mxu0 0
        %628 = vmatpush.bf16.msra.mxu0 0
        %629 = vmatpush.bf16.msra.mxu0 %v616
        %630 = vmatmul.bf16.gmra.mxu0 %v614
        %v631 = vpop.f32.mrf.mxu0
        %v632 = vadd.f32 %v572, %v631
        %v633 = vpop.f32.mrf.mxu0
        %v634 = vadd.f32 %v574, %v633
        %635 = vdwg.mxu0
        %636 = vmatpush.bf16.msra.mxu0 0
        %637 = vmatpush.bf16.msra.mxu0 0
        %638 = vmatpush.bf16.msra.mxu0 0
        %639 = vmatpush.bf16.msra.mxu0 0
        %640 = vmatpush.bf16.msra.mxu0 0
        %641 = vmatpush.bf16.msra.mxu0 0
        %642 = vmatpush.bf16.msra.mxu0 0
        %643 = vmatpush.bf16.msra.mxu0 %v618
        %644 = vmatmul.bf16.gmra.mxu0 %v614
        %v645 = vpop.f32.mrf.mxu0
        %v646 = vadd.f32 %v586, %v645
        %v647 = vpop.f32.mrf.mxu0
        %v648 = vadd.f32 %v588, %v647
        %649 = vdwg.mxu0
        %650 = vmatpush.bf16.msra.mxu0 0
        %651 = vmatpush.bf16.msra.mxu0 0
        %652 = vmatpush.bf16.msra.mxu0 0
        %653 = vmatpush.bf16.msra.mxu0 0
        %654 = vmatpush.bf16.msra.mxu0 0
        %655 = vmatpush.bf16.msra.mxu0 0
        %656 = vmatpush.bf16.msra.mxu0 0
        %657 = vmatpush.bf16.msra.mxu0 %v620
        %658 = vmatmul.bf16.gmra.mxu0 %v614
        %v659 = vpop.f32.mrf.mxu0
        %v660 = vadd.f32 %v600, %v659
        %v661 = vpop.f32.mrf.mxu0
        %v662 = vadd.f32 %v602, %v661
        %663 = vdwg.mxu0
        %s664 = scalar_lea.vmem %s429, 16 [#allocation2]
        %v665 = vld [vmem:[%s664] sm:$0xf]
        %v666 = vld [vmem:[%s664 + $0x4] sm:$0xf]
        %v669 = vunpack.c.l.b16 %v665
        %v670 = vunpack.c.l.b16 %v666
        %v671 = vpack.c.b16 %v670, %v669
        %672 = vst [vmem:[#allocation1] ss:$4 sm:$0xff] %v520
        %v673 = vld.sshfl [vmem:[#allocation1] sm:$0xff pattern:$0x73625140]
        %v675 = vld.sshfl [vmem:[#allocation1 + $0x8] sm:$0xff pattern:$0x73625140]
        %v677 = vld.sshfl [vmem:[#allocation1 + $0x10] sm:$0xff pattern:$0x73625140]
        %679 = vrot.lane.b32.xlu0 %v673, 126
        %v680 = vpop.permute.xlu0 %679
        %681 = vrot.lane.b32.xlu0 %v675, 126
        %v682 = vpop.permute.xlu0 %681
        %683 = vrot.lane.b32.xlu0 %v677, 126
        %v684 = vpop.permute.xlu0 %683
        %vm685 = vcmask 1031168
        %v686 = vsel %vm685, %v680, %v682
        %v687 = vsel %vm685, %v682, %v684
        %v689 = vsel %vm548, %v671, 0
        %v692 = vsel %vm552, %v686, 0
        %v695 = vsel %vm552, %v687, 0
        %v698 = vsel %vm552, %v684, 0
        %700 = vmatpush.bf16.msra.mxu0 0
        %701 = vmatpush.bf16.msra.mxu0 0
        %702 = vmatpush.bf16.msra.mxu0 0
        %703 = vmatpush.bf16.msra.mxu0 0
        %704 = vmatpush.bf16.msra.mxu0 0
        %705 = vmatpush.bf16.msra.mxu0 0
        %706 = vmatpush.bf16.msra.mxu0 0
        %707 = vmatpush.bf16.msra.mxu0 %v692
        %708 = vmatmul.bf16.gmra.mxu0 %v689
        %v709 = vpop.f32.mrf.mxu0
        %v710 = vadd.f32 0.0, %v709
        %v711 = vpop.f32.mrf.mxu0
        %v712 = vadd.f32 0.0, %v711
        %713 = vdwg.mxu0
        %714 = vmatpush.bf16.msra.mxu0 0
        %715 = vmatpush.bf16.msra.mxu0 0
        %716 = vmatpush.bf16.msra.mxu0 0
        %717 = vmatpush.bf16.msra.mxu0 0
        %718 = vmatpush.bf16.msra.mxu0 0
        %719 = vmatpush.bf16.msra.mxu0 0
        %720 = vmatpush.bf16.msra.mxu0 0
        %721 = vmatpush.bf16.msra.mxu0 %v695
        %722 = vmatmul.bf16.gmra.mxu0 %v689
        %v723 = vpop.f32.mrf.mxu0
        %v724 = vadd.f32 0.0, %v723
        %v725 = vpop.f32.mrf.mxu0
        %v726 = vadd.f32 0.0, %v725
        %727 = vdwg.mxu0
        %728 = vmatpush.bf16.msra.mxu0 0
        %729 = vmatpush.bf16.msra.mxu0 0
        %730 = vmatpush.bf16.msra.mxu0 0
        %731 = vmatpush.bf16.msra.mxu0 0
        %732 = vmatpush.bf16.msra.mxu0 0
        %733 = vmatpush.bf16.msra.mxu0 0
        %734 = vmatpush.bf16.msra.mxu0 0
        %735 = vmatpush.bf16.msra.mxu0 %v698
        %736 = vmatmul.bf16.gmra.mxu0 %v689
        %v737 = vpop.f32.mrf.mxu0
        %v738 = vadd.f32 0.0, %v737
        %v739 = vpop.f32.mrf.mxu0
        %v740 = vadd.f32 0.0, %v739
        %741 = vdwg.mxu0
        %v742 = vadd.f32 %v632, %v710
        %v743 = vadd.f32 %v646, %v724
        %v744 = vadd.f32 %v660, %v738
        %v745 = vadd.f32 %v634, %v712
        %v746 = vadd.f32 %v648, %v726
        %v747 = vadd.f32 %v662, %v740
        %s748 = scalar_lea.vmem %s429, 24 [#allocation2]
        %v749 = vld [vmem:[%s748] sm:$0xf]
        %v750 = vld [vmem:[%s748 + $0x4] sm:$0xf]
        %v753 = vunpack.c.l.b16 %v749
        %v754 = vunpack.c.l.b16 %v750
        %v755 = vpack.c.b16 %v754, %v753
        %756 = vst [vmem:[#allocation1] ss:$4 sm:$0xff] %v520
        %v757 = vld.sshfl [vmem:[#allocation1] sm:$0xff pattern:$0x73625140]
        %v759 = vld.sshfl [vmem:[#allocation1 + $0x8] sm:$0xff pattern:$0x73625140]
        %v761 = vld.sshfl [vmem:[#allocation1 + $0x10] sm:$0xff pattern:$0x73625140]
        %763 = vrot.lane.b32.xlu0 %v757, 110
        %v764 = vpop.permute.xlu0 %763
        %765 = vrot.lane.b32.xlu0 %v759, 110
        %v766 = vpop.permute.xlu0 %765
        %767 = vrot.lane.b32.xlu0 %v761, 110
        %v768 = vpop.permute.xlu0 %767
        %vm769 = vcmask 900096
        %v770 = vsel %vm769, %v764, %v766
        %v771 = vsel %vm769, %v766, %v768
        %v773 = vsel %vm548, %v755, 0
        %v776 = vsel %vm552, %v770, 0
        %v779 = vsel %vm552, %v771, 0
        %v782 = vsel %vm552, %v768, 0
        %784 = vmatpush.bf16.msra.mxu0 0
        %785 = vmatpush.bf16.msra.mxu0 0
        %786 = vmatpush.bf16.msra.mxu0 0
        %787 = vmatpush.bf16.msra.mxu0 0
        %788 = vmatpush.bf16.msra.mxu0 0
        %789 = vmatpush.bf16.msra.mxu0 0
        %790 = vmatpush.bf16.msra.mxu0 0
        %791 = vmatpush.bf16.msra.mxu0 %v776
        %792 = vmatmul.bf16.gmra.mxu0 %v773
        %v793 = vpop.f32.mrf.mxu0
        %v794 = vadd.f32 0.0, %v793
        %v795 = vpop.f32.mrf.mxu0
        %v796 = vadd.f32 0.0, %v795
        %797 = vdwg.mxu0
        %798 = vmatpush.bf16.msra.mxu0 0
        %799 = vmatpush.bf16.msra.mxu0 0
        %800 = vmatpush.bf16.msra.mxu0 0
        %801 = vmatpush.bf16.msra.mxu0 0
        %802 = vmatpush.bf16.msra.mxu0 0
        %803 = vmatpush.bf16.msra.mxu0 0
        %804 = vmatpush.bf16.msra.mxu0 0
        %805 = vmatpush.bf16.msra.mxu0 %v779
        %806 = vmatmul.bf16.gmra.mxu0 %v773
        %v807 = vpop.f32.mrf.mxu0
        %v808 = vadd.f32 0.0, %v807
        %v809 = vpop.f32.mrf.mxu0
        %v810 = vadd.f32 0.0, %v809
        %811 = vdwg.mxu0
        %812 = vmatpush.bf16.msra.mxu0 0
        %813 = vmatpush.bf16.msra.mxu0 0
        %814 = vmatpush.bf16.msra.mxu0 0
        %815 = vmatpush.bf16.msra.mxu0 0
        %816 = vmatpush.bf16.msra.mxu0 0
        %817 = vmatpush.bf16.msra.mxu0 0
        %818 = vmatpush.bf16.msra.mxu0 0
        %819 = vmatpush.bf16.msra.mxu0 %v782
        %820 = vmatmul.bf16.gmra.mxu0 %v773
        %v821 = vpop.f32.mrf.mxu0
        %v822 = vadd.f32 0.0, %v821
        %v823 = vpop.f32.mrf.mxu0
        %v824 = vadd.f32 0.0, %v823
        %825 = vdwg.mxu0
        %v826 = vadd.f32 %v742, %v794
        %v827 = vadd.f32 %v743, %v808
        %v828 = vadd.f32 %v744, %v822
        %v829 = vadd.f32 %v745, %v796
        %v830 = vadd.f32 %v746, %v810
        %v831 = vadd.f32 %v747, %v824
        %s832 = scalar_lea.vmem %s429, 32 [#allocation2]
        %v833 = vld [vmem:[%s832] sm:$0xf]
        %v834 = vld [vmem:[%s832 + $0x4] sm:$0xf]
        %v837 = vunpack.c.l.b16 %v833
        %v838 = vunpack.c.l.b16 %v834
        %v839 = vpack.c.b16 %v838, %v837
        %840 = vst [vmem:[#allocation1] ss:$4 sm:$0xff] %v520
        %v841 = vld.sshfl [vmem:[#allocation1] sm:$0xff pattern:$0x73625140]
        %v843 = vld.sshfl [vmem:[#allocation1 + $0x8] sm:$0xff pattern:$0x73625140]
        %v845 = vld.sshfl [vmem:[#allocation1 + $0x10] sm:$0xff pattern:$0x73625140]
        %847 = vrot.lane.b32.xlu0 %v841, 109
        %v848 = vpop.permute.xlu0 %847
        %849 = vrot.lane.b32.xlu0 %v843, 109
        %v850 = vpop.permute.xlu0 %849
        %851 = vrot.lane.b32.xlu0 %v845, 109
        %v852 = vpop.permute.xlu0 %851
        %vm853 = vcmask 891904
        %v854 = vsel %vm853, %v848, %v850
        %v855 = vsel %vm853, %v850, %v852
        %v857 = vsel %vm548, %v839, 0
        %v860 = vsel %vm552, %v854, 0
        %v863 = vsel %vm552, %v855, 0
        %v866 = vsel %vm552, %v852, 0
        %868 = vmatpush.bf16.msra.mxu0 0
        %869 = vmatpush.bf16.msra.mxu0 0
        %870 = vmatpush.bf16.msra.mxu0 0
        %871 = vmatpush.bf16.msra.mxu0 0
        %872 = vmatpush.bf16.msra.mxu0 0
        %873 = vmatpush.bf16.msra.mxu0 0
        %874 = vmatpush.bf16.msra.mxu0 0
        %875 = vmatpush.bf16.msra.mxu0 %v860
        %876 = vmatmul.bf16.gmra.mxu0 %v857
        %v877 = vpop.f32.mrf.mxu0
        %v878 = vadd.f32 0.0, %v877
        %v879 = vpop.f32.mrf.mxu0
        %v880 = vadd.f32 0.0, %v879
        %881 = vdwg.mxu0
        %882 = vmatpush.bf16.msra.mxu0 0
        %883 = vmatpush.bf16.msra.mxu0 0
        %884 = vmatpush.bf16.msra.mxu0 0
        %885 = vmatpush.bf16.msra.mxu0 0
        %886 = vmatpush.bf16.msra.mxu0 0
        %887 = vmatpush.bf16.msra.mxu0 0
        %888 = vmatpush.bf16.msra.mxu0 0
        %889 = vmatpush.bf16.msra.mxu0 %v863
        %890 = vmatmul.bf16.gmra.mxu0 %v857
        %v891 = vpop.f32.mrf.mxu0
        %v892 = vadd.f32 0.0, %v891
        %v893 = vpop.f32.mrf.mxu0
        %v894 = vadd.f32 0.0, %v893
        %895 = vdwg.mxu0
        %896 = vmatpush.bf16.msra.mxu0 0
        %897 = vmatpush.bf16.msra.mxu0 0
        %898 = vmatpush.bf16.msra.mxu0 0
        %899 = vmatpush.bf16.msra.mxu0 0
        %900 = vmatpush.bf16.msra.mxu0 0
        %901 = vmatpush.bf16.msra.mxu0 0
        %902 = vmatpush.bf16.msra.mxu0 0
        %903 = vmatpush.bf16.msra.mxu0 %v866
        %904 = vmatmul.bf16.gmra.mxu0 %v857
        %v905 = vpop.f32.mrf.mxu0
        %v906 = vadd.f32 0.0, %v905
        %v907 = vpop.f32.mrf.mxu0
        %v908 = vadd.f32 0.0, %v907
        %909 = vdwg.mxu0
        %v910 = vadd.f32 %v826, %v878
        %v911 = vadd.f32 %v827, %v892
        %v912 = vadd.f32 %v828, %v906
        %v913 = vadd.f32 %v829, %v880
        %v914 = vadd.f32 %v830, %v894
        %v915 = vadd.f32 %v831, %v908
        %s916 = scalar_lea.vmem %s429, 40 [#allocation2]
        %v917 = vld [vmem:[%s916] sm:$0xf]
        %v918 = vld [vmem:[%s916 + $0x4] sm:$0xf]
        %v921 = vunpack.c.l.b16 %v917
        %v922 = vunpack.c.l.b16 %v918
        %v923 = vpack.c.b16 %v922, %v921
        %924 = vst [vmem:[#allocation1] ss:$4 sm:$0xff] %v520
        %v925 = vld.sshfl [vmem:[#allocation1] sm:$0xff pattern:$0x73625140]
        %v927 = vld.sshfl [vmem:[#allocation1 + $0x8] sm:$0xff pattern:$0x73625140]
        %v929 = vld.sshfl [vmem:[#allocation1 + $0x10] sm:$0xff pattern:$0x73625140]
        %931 = vrot.lane.b32.xlu0 %v925, 108
        %v932 = vpop.permute.xlu0 %931
        %933 = vrot.lane.b32.xlu0 %v927, 108
        %v934 = vpop.permute.xlu0 %933
        %935 = vrot.lane.b32.xlu0 %v929, 108
        %v936 = vpop.permute.xlu0 %935
        %vm937 = vcmask 883712
        %v938 = vsel %vm937, %v932, %v934
        %v939 = vsel %vm937, %v934, %v936
        %v941 = vsel %vm548, %v923, 0
        %v944 = vsel %vm552, %v938, 0
        %v947 = vsel %vm552, %v939, 0
        %v950 = vsel %vm552, %v936, 0
        %952 = vmatpush.bf16.msra.mxu0 0
        %953 = vmatpush.bf16.msra.mxu0 0
        %954 = vmatpush.bf16.msra.mxu0 0
        %955 = vmatpush.bf16.msra.mxu0 0
        %956 = vmatpush.bf16.msra.mxu0 0
        %957 = vmatpush.bf16.msra.mxu0 0
        %958 = vmatpush.bf16.msra.mxu0 0
        %959 = vmatpush.bf16.msra.mxu0 %v944
        %960 = vmatmul.bf16.gmra.mxu0 %v941
        %v961 = vpop.f32.mrf.mxu0
        %v962 = vadd.f32 0.0, %v961
        %v963 = vpop.f32.mrf.mxu0
        %v964 = vadd.f32 0.0, %v963
        %965 = vdwg.mxu0
        %966 = vmatpush.bf16.msra.mxu0 0
        %967 = vmatpush.bf16.msra.mxu0 0
        %968 = vmatpush.bf16.msra.mxu0 0
        %969 = vmatpush.bf16.msra.mxu0 0
        %970 = vmatpush.bf16.msra.mxu0 0
        %971 = vmatpush.bf16.msra.mxu0 0
        %972 = vmatpush.bf16.msra.mxu0 0
        %973 = vmatpush.bf16.msra.mxu0 %v947
        %974 = vmatmul.bf16.gmra.mxu0 %v941
        %v975 = vpop.f32.mrf.mxu0
        %v976 = vadd.f32 0.0, %v975
        %v977 = vpop.f32.mrf.mxu0
        %v978 = vadd.f32 0.0, %v977
        %979 = vdwg.mxu0
        %980 = vmatpush.bf16.msra.mxu0 0
        %981 = vmatpush.bf16.msra.mxu0 0
        %982 = vmatpush.bf16.msra.mxu0 0
        %983 = vmatpush.bf16.msra.mxu0 0
        %984 = vmatpush.bf16.msra.mxu0 0
        %985 = vmatpush.bf16.msra.mxu0 0
        %986 = vmatpush.bf16.msra.mxu0 0
        %987 = vmatpush.bf16.msra.mxu0 %v950
        %988 = vmatmul.bf16.gmra.mxu0 %v941
        %v989 = vpop.f32.mrf.mxu0
        %v990 = vadd.f32 0.0, %v989
        %v991 = vpop.f32.mrf.mxu0
        %v992 = vadd.f32 0.0, %v991
        %993 = vdwg.mxu0
        %v994 = vadd.f32 %v910, %v962
        %v995 = vadd.f32 %v911, %v976
        %v996 = vadd.f32 %v912, %v990
        %v997 = vadd.f32 %v913, %v964
        %v998 = vadd.f32 %v914, %v978
        %v999 = vadd.f32 %v915, %v992
        %s1000 = scalar_lea.vmem %s429, 48 [#allocation2]
        %v1001 = vld [vmem:[%s1000] sm:$0xf]
        %v1002 = vld [vmem:[%s1000 + $0x4] sm:$0xf]
        %v1005 = vunpack.c.l.b16 %v1001
        %v1006 = vunpack.c.l.b16 %v1002
        %v1007 = vpack.c.b16 %v1006, %v1005
        %1008 = vst [vmem:[#allocation1] ss:$4 sm:$0xff] %v520
        %v1009 = vld.sshfl [vmem:[#allocation1] sm:$0xff pattern:$0x73625140]
        %v1011 = vld.sshfl [vmem:[#allocation1 + $0x8] sm:$0xff pattern:$0x73625140]
        %v1013 = vld.sshfl [vmem:[#allocation1 + $0x10] sm:$0xff pattern:$0x73625140]
        %1015 = vrot.lane.b32.xlu0 %v1009, 92
        %v1016 = vpop.permute.xlu0 %1015
        %1017 = vrot.lane.b32.xlu0 %v1011, 92
        %v1018 = vpop.permute.xlu0 %1017
        %1019 = vrot.lane.b32.xlu0 %v1013, 92
        %v1020 = vpop.permute.xlu0 %1019
        %vm1021 = vcmask 752640
        %v1022 = vsel %vm1021, %v1016, %v1018
        %v1023 = vsel %vm1021, %v1018, %v1020
        %v1025 = vsel %vm548, %v1007, 0
        %v1028 = vsel %vm552, %v1022, 0
        %v1031 = vsel %vm552, %v1023, 0
        %v1034 = vsel %vm552, %v1020, 0
        %1036 = vmatpush.bf16.msra.mxu0 0
        %1037 = vmatpush.bf16.msra.mxu0 0
        %1038 = vmatpush.bf16.msra.mxu0 0
        %1039 = vmatpush.bf16.msra.mxu0 0
        %1040 = vmatpush.bf16.msra.mxu0 0
        %1041 = vmatpush.bf16.msra.mxu0 0
        %1042 = vmatpush.bf16.msra.mxu0 0
        %1043 = vmatpush.bf16.msra.mxu0 %v1028
        %1044 = vmatmul.bf16.gmra.mxu0 %v1025
        %v1045 = vpop.f32.mrf.mxu0
        %v1046 = vadd.f32 0.0, %v1045
        %v1047 = vpop.f32.mrf.mxu0
        %v1048 = vadd.f32 0.0, %v1047
        %1049 = vdwg.mxu0
        %1050 = vmatpush.bf16.msra.mxu0 0
        %1051 = vmatpush.bf16.msra.mxu0 0
        %1052 = vmatpush.bf16.msra.mxu0 0
        %1053 = vmatpush.bf16.msra.mxu0 0
        %1054 = vmatpush.bf16.msra.mxu0 0
        %1055 = vmatpush.bf16.msra.mxu0 0
        %1056 = vmatpush.bf16.msra.mxu0 0
        %1057 = vmatpush.bf16.msra.mxu0 %v1031
        %1058 = vmatmul.bf16.gmra.mxu0 %v1025
        %v1059 = vpop.f32.mrf.mxu0
        %v1060 = vadd.f32 0.0, %v1059
        %v1061 = vpop.f32.mrf.mxu0
        %v1062 = vadd.f32 0.0, %v1061
        %1063 = vdwg.mxu0
        %1064 = vmatpush.bf16.msra.mxu0 0
        %1065 = vmatpush.bf16.msra.mxu0 0
        %1066 = vmatpush.bf16.msra.mxu0 0
        %1067 = vmatpush.bf16.msra.mxu0 0
        %1068 = vmatpush.bf16.msra.mxu0 0
        %1069 = vmatpush.bf16.msra.mxu0 0
        %1070 = vmatpush.bf16.msra.mxu0 0
        %1071 = vmatpush.bf16.msra.mxu0 %v1034
        %1072 = vmatmul.bf16.gmra.mxu0 %v1025
        %v1073 = vpop.f32.mrf.mxu0
        %v1074 = vadd.f32 0.0, %v1073
        %v1075 = vpop.f32.mrf.mxu0
        %v1076 = vadd.f32 0.0, %v1075
        %1077 = vdwg.mxu0
        %v1078 = vadd.f32 %v994, %v1046
        %v1079 = vadd.f32 %v995, %v1060
        %v1080 = vadd.f32 %v996, %v1074
        %v1081 = vadd.f32 %v997, %v1048
        %v1082 = vadd.f32 %v998, %v1062
        %v1083 = vadd.f32 %v999, %v1076
        %s1084 = scalar_lea.vmem %s429, 56 [#allocation2]
        %v1085 = vld [vmem:[%s1084] sm:$0xf]
        %v1086 = vld [vmem:[%s1084 + $0x4] sm:$0xf]
        %v1089 = vunpack.c.l.b16 %v1085
        %v1090 = vunpack.c.l.b16 %v1086
        %v1091 = vpack.c.b16 %v1090, %v1089
        %1092 = vst [vmem:[#allocation1] ss:$4 sm:$0xff] %v520
        %v1093 = vld.sshfl [vmem:[#allocation1] sm:$0xff pattern:$0x73625140]
        %v1095 = vld.sshfl [vmem:[#allocation1 + $0x8] sm:$0xff pattern:$0x73625140]
        %v1097 = vld.sshfl [vmem:[#allocation1 + $0x10] sm:$0xff pattern:$0x73625140]
        %1099 = vrot.lane.b32.xlu0 %v1093, 91
        %v1100 = vpop.permute.xlu0 %1099
        %1101 = vrot.lane.b32.xlu0 %v1095, 91
        %v1102 = vpop.permute.xlu0 %1101
        %1103 = vrot.lane.b32.xlu0 %v1097, 91
        %v1104 = vpop.permute.xlu0 %1103
        %vm1105 = vcmask 744448
        %v1106 = vsel %vm1105, %v1100, %v1102
        %v1107 = vsel %vm1105, %v1102, %v1104
        %v1109 = vsel %vm548, %v1091, 0
        %v1112 = vsel %vm552, %v1106, 0
        %v1115 = vsel %vm552, %v1107, 0
        %v1118 = vsel %vm552, %v1104, 0
        %1120 = vmatpush.bf16.msra.mxu0 0
        %1121 = vmatpush.bf16.msra.mxu0 0
        %1122 = vmatpush.bf16.msra.mxu0 0
        %1123 = vmatpush.bf16.msra.mxu0 0
        %1124 = vmatpush.bf16.msra.mxu0 0
        %1125 = vmatpush.bf16.msra.mxu0 0
        %1126 = vmatpush.bf16.msra.mxu0 0
        %1127 = vmatpush.bf16.msra.mxu0 %v1112
        %1128 = vmatmul.bf16.gmra.mxu0 %v1109
        %v1129 = vpop.f32.mrf.mxu0
        %v1130 = vadd.f32 0.0, %v1129
        %v1131 = vpop.f32.mrf.mxu0
        %v1132 = vadd.f32 0.0, %v1131
        %1133 = vdwg.mxu0
        %1134 = vmatpush.bf16.msra.mxu0 0
        %1135 = vmatpush.bf16.msra.mxu0 0
        %1136 = vmatpush.bf16.msra.mxu0 0
        %1137 = vmatpush.bf16.msra.mxu0 0
        %1138 = vmatpush.bf16.msra.mxu0 0
        %1139 = vmatpush.bf16.msra.mxu0 0
        %1140 = vmatpush.bf16.msra.mxu0 0
        %1141 = vmatpush.bf16.msra.mxu0 %v1115
        %1142 = vmatmul.bf16.gmra.mxu0 %v1109
        %v1143 = vpop.f32.mrf.mxu0
        %v1144 = vadd.f32 0.0, %v1143
        %v1145 = vpop.f32.mrf.mxu0
        %v1146 = vadd.f32 0.0, %v1145
        %1147 = vdwg.mxu0
        %1148 = vmatpush.bf16.msra.mxu0 0
        %1149 = vmatpush.bf16.msra.mxu0 0
        %1150 = vmatpush.bf16.msra.mxu0 0
        %1151 = vmatpush.bf16.msra.mxu0 0
        %1152 = vmatpush.bf16.msra.mxu0 0
        %1153 = vmatpush.bf16.msra.mxu0 0
        %1154 = vmatpush.bf16.msra.mxu0 0
        %1155 = vmatpush.bf16.msra.mxu0 %v1118
        %1156 = vmatmul.bf16.gmra.mxu0 %v1109
        %v1157 = vpop.f32.mrf.mxu0
        %v1158 = vadd.f32 0.0, %v1157
        %v1159 = vpop.f32.mrf.mxu0
        %v1160 = vadd.f32 0.0, %v1159
        %1161 = vdwg.mxu0
        %v1162 = vadd.f32 %v1078, %v1130
        %v1163 = vadd.f32 %v1079, %v1144
        %v1164 = vadd.f32 %v1080, %v1158
        %v1165 = vadd.f32 %v1081, %v1132
        %v1166 = vadd.f32 %v1082, %v1146
        %v1167 = vadd.f32 %v1083, %v1160
        %s1168 = scalar_lea.vmem %s429, 64 [#allocation2]
        %v1169 = vld [vmem:[%s1168] sm:$0xf]
        %v1170 = vld [vmem:[%s1168 + $0x4] sm:$0xf]
        %v1173 = vunpack.c.l.b16 %v1169
        %v1174 = vunpack.c.l.b16 %v1170
        %v1175 = vpack.c.b16 %v1174, %v1173
        %1176 = vst [vmem:[#allocation1] ss:$4 sm:$0xff] %v520
        %v1177 = vld.sshfl [vmem:[#allocation1] sm:$0xff pattern:$0x73625140]
        %v1179 = vld.sshfl [vmem:[#allocation1 + $0x8] sm:$0xff pattern:$0x73625140]
        %v1181 = vld.sshfl [vmem:[#allocation1 + $0x10] sm:$0xff pattern:$0x73625140]
        %1183 = vrot.lane.b32.xlu0 %v1177, 90
        %v1184 = vpop.permute.xlu0 %1183
        %1185 = vrot.lane.b32.xlu0 %v1179, 90
        %v1186 = vpop.permute.xlu0 %1185
        %1187 = vrot.lane.b32.xlu0 %v1181, 90
        %v1188 = vpop.permute.xlu0 %1187
        %vm1189 = vcmask 736256
        %v1190 = vsel %vm1189, %v1184, %v1186
        %v1191 = vsel %vm1189, %v1186, %v1188
        %v1193 = vsel %vm548, %v1175, 0
        %v1196 = vsel %vm552, %v1190, 0
        %v1199 = vsel %vm552, %v1191, 0
        %v1202 = vsel %vm552, %v1188, 0
        %1204 = vmatpush.bf16.msra.mxu0 0
        %1205 = vmatpush.bf16.msra.mxu0 0
        %1206 = vmatpush.bf16.msra.mxu0 0
        %1207 = vmatpush.bf16.msra.mxu0 0
        %1208 = vmatpush.bf16.msra.mxu0 0
        %1209 = vmatpush.bf16.msra.mxu0 0
        %1210 = vmatpush.bf16.msra.mxu0 0
        %1211 = vmatpush.bf16.msra.mxu0 %v1196
        %1212 = vmatmul.bf16.gmra.mxu0 %v1193
        %v1213 = vpop.f32.mrf.mxu0
        %v1214 = vadd.f32 0.0, %v1213
        %v1215 = vpop.f32.mrf.mxu0
        %v1216 = vadd.f32 0.0, %v1215
        %1217 = vdwg.mxu0
        %1218 = vmatpush.bf16.msra.mxu0 0
        %1219 = vmatpush.bf16.msra.mxu0 0
        %1220 = vmatpush.bf16.msra.mxu0 0
        %1221 = vmatpush.bf16.msra.mxu0 0
        %1222 = vmatpush.bf16.msra.mxu0 0
        %1223 = vmatpush.bf16.msra.mxu0 0
        %1224 = vmatpush.bf16.msra.mxu0 0
        %1225 = vmatpush.bf16.msra.mxu0 %v1199
        %1226 = vmatmul.bf16.gmra.mxu0 %v1193
        %v1227 = vpop.f32.mrf.mxu0
        %v1228 = vadd.f32 0.0, %v1227
        %v1229 = vpop.f32.mrf.mxu0
        %v1230 = vadd.f32 0.0, %v1229
        %1231 = vdwg.mxu0
        %1232 = vmatpush.bf16.msra.mxu0 0
        %1233 = vmatpush.bf16.msra.mxu0 0
        %1234 = vmatpush.bf16.msra.mxu0 0
        %1235 = vmatpush.bf16.msra.mxu0 0
        %1236 = vmatpush.bf16.msra.mxu0 0
        %1237 = vmatpush.bf16.msra.mxu0 0
        %1238 = vmatpush.bf16.msra.mxu0 0
        %1239 = vmatpush.bf16.msra.mxu0 %v1202
        %1240 = vmatmul.bf16.gmra.mxu0 %v1193
        %v1241 = vpop.f32.mrf.mxu0
        %v1242 = vadd.f32 0.0, %v1241
        %v1243 = vpop.f32.mrf.mxu0
        %v1244 = vadd.f32 0.0, %v1243
        %1245 = vdwg.mxu0
        %v1246 = vadd.f32 %v1162, %v1214
        %v1247 = vadd.f32 %v1163, %v1228
        %v1248 = vadd.f32 %v1164, %v1242
        %v1249 = vadd.f32 %v1165, %v1216
        %v1250 = vadd.f32 %v1166, %v1230
        %v1251 = vadd.f32 %v1167, %v1244
        %v1252 = vld [vmem:[%s496] sm:$0xff]
        %v1253 = vld [vmem:[%s496 + $0x8] sm:$0xff]
        %1255 = vset.pattern.permute.xlu0 0
        %1256 = vperm.xlu0 %1255, %v1252
        %v1257 = vpop.permute.xlu0 %1256
        %1260 = vset.pattern.permute.xlu0 0
        %1261 = vperm.xlu0 %1260, %v1253
        %v1262 = vpop.permute.xlu0 %1261
        %v1264 = vadd.f32 %v1246, %v1257
        %v1265 = vadd.f32 %v1247, %v1257
        %v1266 = vadd.f32 %v1248, %v1257
        %v1267 = vadd.f32 %v1249, %v1262
        %v1268 = vadd.f32 %v1250, %v1262
        %v1269 = vadd.f32 %v1251, %v1262
        %v1270 = vld [vmem:[%s5] sm:$0x7]
        %v1271 = vld [vmem:[%s6] sm:$0xff]
        %v1272 = vld [vmem:[%s6 + $0x8] sm:$0xff]
        %v1274 = vperm.slane %v1270, 0
        %v1275 = vperm.slane %v1270, 1
        %v1276 = vperm.slane %v1270, 2
        %v1280 = vmul.f32 %v1264, %v1274
        %v1281 = vmul.f32 %v1265, %v1275
        %v1282 = vmul.f32 %v1266, %v1276
        %v1283 = vmul.f32 %v1267, %v1274
        %v1284 = vmul.f32 %v1268, %v1275
        %v1285 = vmul.f32 %v1269, %v1276
        %v1286 = vadd.f32 %v1280, %v1281
        %vm1287 = vcmask 261120
        %v1288 = vsel %vm1287, %v1282, 0.0
        %v1289 = vadd.f32 %v1286, %v1288
        %1290 = vadd.xlane.f32.xlu0 %v1289
        %v1291 = vpop.xlane.xlu0 %1290
        %v1292 = vadd.f32 %v1283, %v1284
        %v1293 = vsel %vm1287, %v1285, 0.0
        %v1294 = vadd.f32 %v1292, %v1293
        %1295 = vadd.xlane.f32.xlu0 %v1294
        %v1296 = vpop.xlane.xlu0 %1295
        %vm1297 = vcmask 130048
        %v1299 = vsel %vm1297, %v1271, 0
        %v1302 = vsel %vm1297, %v1272, 0
        %1304 = vmatpush.msra.mxu0 0.0
        %1305 = vmatpush.msra.mxu0 0.0
        %1306 = vmatpush.msra.mxu0 0.0
        %1307 = vmatpush.msra.mxu0 0.0
        %1308 = vmatpush.msra.mxu0 0.0
        %1309 = vmatpush.msra.mxu0 0.0
        %1310 = vmatpush.msra.mxu0 0.0
        %1311 = vmatpush.msra.mxu0 0.0
        %1312 = vmatpush.msra.mxu0 0.0
        %1313 = vmatpush.msra.mxu0 0.0
        %1314 = vmatpush.msra.mxu0 0.0
        %1315 = vmatpush.msra.mxu0 0.0
        %1316 = vmatpush.msra.mxu0 0.0
        %1317 = vmatpush.msra.mxu0 0.0
        %1318 = vmatpush.msra.mxu0 %v1296
        %1319 = vmatpush.msra.mxu0 %v1291
        %1320 = vmatmul.f32.gmra.mxu0 %v1299
        %v1321 = vpop.f32.mrf.mxu0
        %v1322 = vadd.f32 0.0, %v1321
        %1323 = vmatmul.f32.gmra.mxu0 %v1302
        %v1324 = vpop.f32.mrf.mxu0
        %v1325 = vadd.f32 0.0, %v1324
        %1326 = vdwg.mxu0
        %v1327 = vmul.f32 %v1322, 0.0009765625
        %v1328 = vmul.f32 %v1325, 0.0009765625
        %1330 = vset.pattern.permute.xlu0 0
        %1331 = vperm.xlu0 %1330, %v1327
        %v1332 = vpop.permute.xlu0 %1331
        %1335 = vset.pattern.permute.xlu0 0
        %1336 = vperm.xlu0 %1335, %v1328
        %v1337 = vpop.permute.xlu0 %1336
        %v1339 = vsub.f32 %v1264, %v1332
        %v1340 = vsub.f32 %v1265, %v1332
        %v1341 = vsub.f32 %v1266, %v1332
        %v1342 = vsub.f32 %v1267, %v1337
        %v1343 = vsub.f32 %v1268, %v1337
        %v1344 = vsub.f32 %v1269, %v1337
        %v1345 = vmul.f32 %v1339, %v1339
        %v1346 = vmul.f32 %v1340, %v1340
        %v1347 = vmul.f32 %v1341, %v1341
        %v1348 = vmul.f32 %v1342, %v1342
        %v1349 = vmul.f32 %v1343, %v1343
        %v1350 = vmul.f32 %v1344, %v1344
        %v1351 = vmul.f32 %v1345, %v1274
        %v1352 = vmul.f32 %v1346, %v1275
        %v1353 = vmul.f32 %v1347, %v1276
        %v1354 = vmul.f32 %v1348, %v1274
        %v1355 = vmul.f32 %v1349, %v1275
        %v1356 = vmul.f32 %v1350, %v1276
        %v1357 = vadd.f32 %v1351, %v1352
        %v1358 = vsel %vm1287, %v1353, 0.0
        %v1359 = vadd.f32 %v1357, %v1358
        %1360 = vadd.xlane.f32.xlu0 %v1359
        %v1361 = vpop.xlane.xlu0 %1360
        %v1362 = vadd.f32 %v1354, %v1355
        %v1363 = vsel %vm1287, %v1356, 0.0
        %v1364 = vadd.f32 %v1362, %v1363
        %1365 = vadd.xlane.f32.xlu0 %v1364
        %v1366 = vpop.xlane.xlu0 %1365
        %1367 = vmatpush.msra.mxu0 0.0
        %1368 = vmatpush.msra.mxu0 0.0
        %1369 = vmatpush.msra.mxu0 0.0
        %1370 = vmatpush.msra.mxu0 0.0
        %1371 = vmatpush.msra.mxu0 0.0
        %1372 = vmatpush.msra.mxu0 0.0
        %1373 = vmatpush.msra.mxu0 0.0
        %1374 = vmatpush.msra.mxu0 0.0
        %1375 = vmatpush.msra.mxu0 0.0
        %1376 = vmatpush.msra.mxu0 0.0
        %1377 = vmatpush.msra.mxu0 0.0
        %1378 = vmatpush.msra.mxu0 0.0
        %1379 = vmatpush.msra.mxu0 0.0
        %1380 = vmatpush.msra.mxu0 0.0
        %1381 = vmatpush.msra.mxu0 %v1366
        %1382 = vmatpush.msra.mxu0 %v1361
        %1383 = vmatmul.f32.gmra.mxu0 %v1299
        %v1384 = vpop.f32.mrf.mxu0
        %v1385 = vadd.f32 0.0, %v1384
        %1386 = vmatmul.f32.gmra.mxu0 %v1302
        %v1387 = vpop.f32.mrf.mxu0
        %v1388 = vadd.f32 0.0, %v1387
        %1389 = vdwg.mxu0
        %v1390 = vmul.f32 %v1385, 0.0009765625
        %v1391 = vmul.f32 %v1388, 0.0009765625
        %v1392 = vadd.f32 %v1390, 1e-05
        %v1393 = vadd.f32 %v1391, 1e-05
        %v1394 = vrsqrt.pop %v1392
        %v1395 = vmul.f32 %v1394, %v1392
        %v1396 = vmul.f32 %v1395, %v1394
        %v1397 = vmul.f32 0.5, %v1396
        %v1398 = vsub.f32 1.5, %v1397
        %v1399 = vmul.f32 %v1394, %v1398
        %vm1400 = vweird.f32 %v1392
        %vm1401 = vweird.f32 %v1394
        %vm1402 = vmor %vm1400, %vm1401
        %v1403 = vsel %vm1402, %v1394, %v1399
        %v1404 = vrsqrt.pop %v1393
        %v1405 = vmul.f32 %v1404, %v1393
        %v1406 = vmul.f32 %v1405, %v1404
        %v1407 = vmul.f32 0.5, %v1406
        %v1408 = vsub.f32 1.5, %v1407
        %v1409 = vmul.f32 %v1404, %v1408
        %vm1410 = vweird.f32 %v1393
        %vm1411 = vweird.f32 %v1404
        %vm1412 = vmor %vm1410, %vm1411
        %v1413 = vsel %vm1412, %v1404, %v1409
        %1415 = vset.pattern.permute.xlu0 0
        %1416 = vperm.xlu0 %1415, %v1403
        %v1417 = vpop.permute.xlu0 %1416
        %1420 = vset.pattern.permute.xlu0 0
        %1421 = vperm.xlu0 %1420, %v1413
        %v1422 = vpop.permute.xlu0 %1421
        %v1424 = vmul.f32 %v1339, %v1417
        %v1425 = vmul.f32 %v1340, %v1417
        %v1426 = vmul.f32 %v1341, %v1417
        %v1427 = vmul.f32 %v1342, %v1422
        %v1428 = vmul.f32 %v1343, %v1422
        %v1429 = vmul.f32 %v1344, %v1422
        %v1430 = vld [vmem:[%s506] sm:$0xff]
        %v1431 = vld [vmem:[%s506 + $0x8] sm:$0xff]
        %1433 = vset.pattern.permute.xlu0 0
        %1434 = vperm.xlu0 %1433, %v1430
        %v1435 = vpop.permute.xlu0 %1434
        %1438 = vset.pattern.permute.xlu0 0
        %1439 = vperm.xlu0 %1438, %v1431
        %v1440 = vpop.permute.xlu0 %1439
        %v1442 = vmul.f32 %v1424, %v1435
        %v1443 = vmul.f32 %v1425, %v1435
        %v1444 = vmul.f32 %v1426, %v1435
        %v1445 = vmul.f32 %v1427, %v1440
        %v1446 = vmul.f32 %v1428, %v1440
        %v1447 = vmul.f32 %v1429, %v1440
        %v1448 = vld [vmem:[%s516] sm:$0xff]
        %v1449 = vld [vmem:[%s516 + $0x8] sm:$0xff]
        %1451 = vset.pattern.permute.xlu0 0
        %1452 = vperm.xlu0 %1451, %v1448
        %v1453 = vpop.permute.xlu0 %1452
        %1456 = vset.pattern.permute.xlu0 0
        %1457 = vperm.xlu0 %1456, %v1449
        %v1458 = vpop.permute.xlu0 %1457
        %v1460 = vadd.f32 %v1442, %v1453
        %v1461 = vadd.f32 %v1443, %v1453
        %v1462 = vadd.f32 %v1444, %v1453
        %v1463 = vadd.f32 %v1445, %v1458
        %v1464 = vadd.f32 %v1446, %v1458
        %v1465 = vadd.f32 %v1447, %v1458
        %v1466 = vxor.u32 %v1460, 2147483648
        %v1467 = vxor.u32 %v1461, 2147483648
        %v1468 = vxor.u32 %v1462, 2147483648
        %v1469 = vxor.u32 %v1463, 2147483648
        %v1470 = vxor.u32 %v1464, 2147483648
        %v1471 = vxor.u32 %v1465, 2147483648
        %v1472 = vmul.f32 %v1466, 1.442695
        %v1473 = vpow.pop %v1472
        %v1474 = vmul.f32 %v1467, 1.442695
        %v1475 = vpow.pop %v1474
        %v1476 = vmul.f32 %v1468, 1.442695
        %v1477 = vpow.pop %v1476
        %v1478 = vmul.f32 %v1469, 1.442695
        %v1479 = vpow.pop %v1478
        %v1480 = vmul.f32 %v1470, 1.442695
        %v1481 = vpow.pop %v1480
        %v1482 = vmul.f32 %v1471, 1.442695
        %v1483 = vpow.pop %v1482
        %v1484 = vadd.f32 %v1473, 1.0
        %v1485 = vadd.f32 %v1475, 1.0
        %v1486 = vadd.f32 %v1477, 1.0
        %v1487 = vadd.f32 %v1479, 1.0
        %v1488 = vadd.f32 %v1481, 1.0
        %v1489 = vadd.f32 %v1483, 1.0
        %v1490 = vrcp.pop %v1484
        %v1491 = vmul.f32 %v1484, %v1490
        %v1492 = vsub.f32 1.0, %v1491
        %v1493 = vmul.f32 %v1490, %v1492
        %v1494 = vadd.f32 %v1490, %v1493
        %vm1495 = vweird.f32 %v1484
        %vm1496 = vweird.f32 %v1490
        %vm1497 = vmor %vm1495, %vm1496
        %v1498 = vsel %vm1497, %v1490, %v1494
        %v1499 = vand.u32 2147483647, %v1484
        %vm1500 = vcmp.eq.f32.partialorder %v1499, 8.507059e+37
        %v1501 = vand.u32 %v1484, 2147483648
        %v1502 = vor.u32 1.1754944e-38, %v1501
        %v1503 = vsel %vm1500, %v1502, %v1498
        %v1504 = vmul.f32 1.0, %v1503
        %v1505 = vrcp.pop %v1485
        %v1506 = vmul.f32 %v1485, %v1505
        %v1507 = vsub.f32 1.0, %v1506
        %v1508 = vmul.f32 %v1505, %v1507
        %v1509 = vadd.f32 %v1505, %v1508
        %vm1510 = vweird.f32 %v1485
        %vm1511 = vweird.f32 %v1505
        %vm1512 = vmor %vm1510, %vm1511
        %v1513 = vsel %vm1512, %v1505, %v1509
        %v1514 = vand.u32 2147483647, %v1485
        %vm1515 = vcmp.eq.f32.partialorder %v1514, 8.507059e+37
        %v1516 = vand.u32 %v1485, 2147483648
        %v1517 = vor.u32 1.1754944e-38, %v1516
        %v1518 = vsel %vm1515, %v1517, %v1513
        %v1519 = vmul.f32 1.0, %v1518
        %v1520 = vrcp.pop %v1486
        %v1521 = vmul.f32 %v1486, %v1520
        %v1522 = vsub.f32 1.0, %v1521
        %v1523 = vmul.f32 %v1520, %v1522
        %v1524 = vadd.f32 %v1520, %v1523
        %vm1525 = vweird.f32 %v1486
        %vm1526 = vweird.f32 %v1520
        %vm1527 = vmor %vm1525, %vm1526
        %v1528 = vsel %vm1527, %v1520, %v1524
        %v1529 = vand.u32 2147483647, %v1486
        %vm1530 = vcmp.eq.f32.partialorder %v1529, 8.507059e+37
        %v1531 = vand.u32 %v1486, 2147483648
        %v1532 = vor.u32 1.1754944e-38, %v1531
        %v1533 = vsel %vm1530, %v1532, %v1528
        %v1534 = vmul.f32 1.0, %v1533
        %v1535 = vrcp.pop %v1487
        %v1536 = vmul.f32 %v1487, %v1535
        %v1537 = vsub.f32 1.0, %v1536
        %v1538 = vmul.f32 %v1535, %v1537
        %v1539 = vadd.f32 %v1535, %v1538
        %vm1540 = vweird.f32 %v1487
        %vm1541 = vweird.f32 %v1535
        %vm1542 = vmor %vm1540, %vm1541
        %v1543 = vsel %vm1542, %v1535, %v1539
        %v1544 = vand.u32 2147483647, %v1487
        %vm1545 = vcmp.eq.f32.partialorder %v1544, 8.507059e+37
        %v1546 = vand.u32 %v1487, 2147483648
        %v1547 = vor.u32 1.1754944e-38, %v1546
        %v1548 = vsel %vm1545, %v1547, %v1543
        %v1549 = vmul.f32 1.0, %v1548
        %v1550 = vrcp.pop %v1488
        %v1551 = vmul.f32 %v1488, %v1550
        %v1552 = vsub.f32 1.0, %v1551
        %v1553 = vmul.f32 %v1550, %v1552
        %v1554 = vadd.f32 %v1550, %v1553
        %vm1555 = vweird.f32 %v1488
        %vm1556 = vweird.f32 %v1550
        %vm1557 = vmor %vm1555, %vm1556
        %v1558 = vsel %vm1557, %v1550, %v1554
        %v1559 = vand.u32 2147483647, %v1488
        %vm1560 = vcmp.eq.f32.partialorder %v1559, 8.507059e+37
        %v1561 = vand.u32 %v1488, 2147483648
        %v1562 = vor.u32 1.1754944e-38, %v1561
        %v1563 = vsel %vm1560, %v1562, %v1558
        %v1564 = vmul.f32 1.0, %v1563
        %v1565 = vrcp.pop %v1489
        %v1566 = vmul.f32 %v1489, %v1565
        %v1567 = vsub.f32 1.0, %v1566
        %v1568 = vmul.f32 %v1565, %v1567
        %v1569 = vadd.f32 %v1565, %v1568
        %vm1570 = vweird.f32 %v1489
        %vm1571 = vweird.f32 %v1565
        %vm1572 = vmor %vm1570, %vm1571
        %v1573 = vsel %vm1572, %v1565, %v1569
        %v1574 = vand.u32 2147483647, %v1489
        %vm1575 = vcmp.eq.f32.partialorder %v1574, 8.507059e+37
        %v1576 = vand.u32 %v1489, 2147483648
        %v1577 = vor.u32 1.1754944e-38, %v1576
        %v1578 = vsel %vm1575, %v1577, %v1573
        %v1579 = vmul.f32 1.0, %v1578
        %v1580 = vmul.f32 %v1460, %v1504
        %v1581 = vmul.f32 %v1461, %v1519
        %v1582 = vmul.f32 %v1462, %v1534
        %v1583 = vmul.f32 %v1463, %v1549
        %v1584 = vmul.f32 %v1464, %v1564
        %v1585 = vmul.f32 %v1465, %v1579
        %1586 = vst [vmem:[%s485] sm:$0xff] %v1580
        %1587 = vst [vmem:[%s485 + $0x8] sm:$0xff] %v1581
        %1588 = vst.msk [vmem:[%s485 + $0x10] sm:$0xff] %vm1287, %v1582
        %1589 = vst [vmem:[%s485 + $0x18] sm:$0xff] %v1583
        %1590 = vst [vmem:[%s485 + $0x20] sm:$0xff] %v1584
        %1591 = vst.msk [vmem:[%s485 + $0x28] sm:$0xff] %vm1287, %v1585
        %s1592 = sand.u32 %s219, 1
        %s1593 = scalar_lea.sflag [#allocation4], %s1592
        %s1594 = sand.u32 %s219, 1
        %s1595 = smul.addr %s1594, 48
        %s1596 = scalar_lea.vmem [#allocation3], %s1595
        // Predicated region
        $region90: #{tpu_custom_call.1} parent=84 // pred_check
          %p1597 = pneg %p229
        $region91: #{tpu_custom_call.1} parent=84 // pred_check_branch
          %1599 = sbr.rel (%p1597) target = $region93
        $region92: #{tpu_custom_call.1} parent=84 // pred_region
          %s1600 = smul.u32 2, %s26
          %1602 = vsyncadd %s1593, 0
          %s1603 = smul.addr %s1600, 3
          %s1604 = smul.addr %s25, 12
          %s1605 = sadd.s32 %s1603, %s1604
          %s1606 = smul.addr %s1605, 8
          %s1607 = scalar_lea.hbm %s7, %s1606
          %s1608 = sshll.u32 %s1596, 4
          %s1609 = int_to_ptr.vmem [resolvable:$true] %s1608
          %s1610 = sshll.u32 %s1607, 4
          %s1611 = int_to_ptr.hbm [resolvable:$true] %s1610
          %1616 = dma.vmem_to_hbm [thread:$0]  %s1609, 768, %s1611, %s1593, 384, 384, 24
        $region93: #{tpu_custom_call.1} parent=84 // pred_fallthru
          _
      $region85: #{tpu_custom_call.1} parent=5 // pred_fallthru
        _
      %p1617 = scmp.le.s32.totalorder 2, %s16
      // Predicated region
      $region94: #{tpu_custom_call.1} parent=5 // pred_check
        %p1618 = pneg %p1617
      $region95: #{tpu_custom_call.1} parent=5 // pred_check_branch
        %1620 = sbr.rel (%p1618) target = $region97
      $region96: #{tpu_custom_call.1} parent=5 // pred_region
        %s1621 = ssub.s32 %s16, 2
        // Predicated region
        $region98: #{tpu_custom_call.1} parent=96 // pred_check
          %p1622 = pneg %p235
        $region99: #{tpu_custom_call.1} parent=96 // pred_check_branch
          %1624 = sbr.rel (%p1622) target = $region101
        $region100: #{tpu_custom_call.1} parent=96 // pred_region
          %s1625 = sand.u32 %s220, 1
          %s1626 = scalar_lea.sflag [#allocation4], %s1625
          %s1627 = sand.u32 %s220, 1
          %s1628 = smul.addr %s1627, 48
          %s1629 = scalar_lea.vmem [#allocation3], %s1628
          %1631 = dma.done %s1626, 768
        $region101: #{tpu_custom_call.1} parent=96 // pred_fallthru
          _
      $region97: #{tpu_custom_call.1} parent=5 // pred_fallthru
        _
    $region6: #{tpu_custom_call.1} parent=1 // loop_footer
      %s20 = sadd.s32 1, %s16
    $region7: #{tpu_custom_call.1} parent=1 // loop_footer_branch
      %15 = sbr.rel target = $region3
    $region8: #{tpu_custom_call.1} parent=1 // loop_exit
      _
    %1632 = vsyncpa [#allocation4], 1
    %s1633 = scalar_lea.sflag [#allocation4], 1
    %1634 = vsyncpa %s1633, 1

</llo_original>
